<compile_context>
chip_gen: v7x
topology: tpu7x:2x2x1
jax: 0.10.0
libtpu: 0.0.40
codegen_flags: <defaults>
</compile_context>

<pallas_src>
import functools

import jax
import jax.numpy as jnp
from jax.experimental import pallas as pl
from jax.experimental.pallas import tpu as pltpu


def _silu(y):
    return y * jax.nn.sigmoid(y)


def fold_bn(bn, eps=1e-5):
    scale = bn['g'] / jnp.sqrt(bn['v'] + eps)
    bias = bn['b'] - bn['m'] * scale
    return scale, bias


# ---------------------------------------------------------------------------
# Generation-aware VMEM budgets.
# ---------------------------------------------------------------------------
def _vmem_capacity_bytes():
    try:
        info = pltpu.get_tpu_info()
        for name in ('vmem_capacity_bytes', 'vmem_bytes', 'vmem_size_bytes'):
            cap = getattr(info, name, None)
            if cap:
                return int(cap)
    except Exception:
        pass
    return 64 * 1024 * 1024          # conservative default (v7x per-core VMEM)


_VMEM_CAP_BYTES = _vmem_capacity_bytes()
# Scoped VMEM limit for the kernels: ~96 MiB on 128 MiB parts (v5e/v6e),
# ~48 MiB on 64 MiB parts (v7x).
_VMEM_LIMIT_BYTES = max(32 * 1024 * 1024,
                        min((_VMEM_CAP_BYTES * 3) // 4, 100 * 1024 * 1024))
_TILE_BUDGET_BYTES = _VMEM_LIMIT_BYTES // 2


# ---------------------------------------------------------------------------
# Kernel 1: fused [channel-concat] + 1x1 conv + BN + SiLU, optionally with the
#           output split along cout (used to emit x1 / x2 separately).
#           Row-tiled matmuls (M = N*H*W), parallel grid.
# ---------------------------------------------------------------------------
def _pw_conv_kernel(*refs, n_in, n_out):
    xs = refs[:n_in]
    ws = refs[n_in:n_in + n_in * n_out]
    ss = refs[n_in + n_in * n_out:n_in + n_in * n_out + n_out]
    bs = refs[n_in + n_in * n_out + n_out:n_in + n_in * n_out + 2 * n_out]
    outs = refs[n_in + n_in * n_out + 2 * n_out:]
    for j in range(n_out):
        acc = None
        for i in range(n_in):
            d = jnp.dot(xs[i][...], ws[j * n_in + i][...],
                        preferred_element_type=jnp.float32)
            acc = d if acc is None else acc + d
        y = acc * ss[j][...] + bs[j][...]          # folded BN, f32 epilogue
        outs[j][...] = _silu(y).astype(outs[j].dtype)


def pointwise_conv_bn_silu(xs, w, scale, bias, *, out_splits=None, tile_m=None):
    """Fused `concat(xs, -1) @ w` + BN + SiLU (optionally split along cout)."""
    M = int(xs[0].shape[0])
    in_splits = [int(x.shape[1]) for x in xs]
    cout = int(w.shape[1])
    single = out_splits is None
    if single:
        out_splits = [cout]
    assert sum(in_splits) == int(w.shape[0]) and sum(out_splits) == cout
    dt = xs[0].dtype
    n_in, n_out = len(in_splits), len(out_splits)

    # Pre-split weights / BN params outside the kernel: the kernel never
    # slices along sublanes (avoids realignment copies for non-x8 channels).
    w_blocks, s_blocks, b_blocks = [], [], []
    co_off = 0
    for cj in out_splits:
        ci_off = 0
        for ci in in_splits:
            w_blocks.append(w[ci_off:ci_off + ci, co_off:co_off + cj].astype(dt))
            ci_off += ci
        s_blocks.append(scale[co_off:co_off + cj].reshape(1, cj).astype(jnp.float32))
        b_blocks.append(bias[co_off:co_off + cj].reshape(1, cj).astype(jnp.float32))
        co_off += cj

    if tile_m is None:
        # Memory-bound: largest row tile whose double-buffered blocks fit the
        # budget (measured roofline keeps improving up to ~1-2K rows).
        per_row = (sum(in_splits) + cout) * jnp.dtype(dt).itemsize * 2
        tile_m = max(512, min(4096, _TILE_BUDGET_BYTES // max(per_row, 1)))
        tile_m = (tile_m // 8) * 8
    tm = min(int(tile_m), M)
    grid = (pl.cdiv(M, tm),)

    in_specs = [pl.BlockSpec((tm, ci), lambda i: (i, 0)) for ci in in_splits]
    in_specs += [pl.BlockSpec(wb.shape, lambda i: (0, 0)) for wb in w_blocks]
    in_specs += [pl.BlockSpec((1, cj), lambda i: (0, 0)) for cj in out_splits]
    in_specs += [pl.BlockSpec((1, cj), lambda i: (0, 0)) for cj in out_splits]
    out_specs = tuple(pl.BlockSpec((tm, cj), lambda i: (i, 0)) for cj in out_splits)
    out_shape = tuple(jax.ShapeDtypeStruct((M, cj), dt) for cj in out_splits)

    kernel = functools.partial(_pw_conv_kernel, n_in=n_in, n_out=n_out)
    outs = pl.pallas_call(
        kernel,
        out_shape=out_shape,
        grid=grid,
        in_specs=in_specs,
        out_specs=out_specs,
        compiler_params=pltpu.CompilerParams(
            dimension_semantics=("parallel",),
            vmem_limit_bytes=_VMEM_LIMIT_BYTES),
    )(*xs, *w_blocks, *s_blocks, *b_blocks)
    return outs[0] if single else outs


# ---------------------------------------------------------------------------
# Kernel 2: fully fused Bottleneck
#   inner 1x1 conv+BN+SiLU -> 3x3 conv (9 accumulated taps)+BN+SiLU
#   -> optional residual add.  Grid = (batch, row-strips).
#   The haloed input strip lives in HBM and is DMA'd manually with a 2-slot
#   double buffer so the next strip's load overlaps the current compute.
# ---------------------------------------------------------------------------
def _bottleneck_kernel(x_hbm, w1_ref, s1_ref, b1_ref, w2_ref, s2_ref, b2_ref,
                       o_ref, xin_ref, sem, *, add, tile_h, n_strips, img_h):
    nn = pl.program_id(0)
    r = pl.program_id(1)
    W = o_ref.shape[2]
    C = xin_ref.shape[-1]
    C2 = o_ref.shape[-1]
    slot = r % 2

    # Uniform 3-copy plan per strip (same byte counts for every strip, so the
    # wait descriptors are strip-independent and double-buffering is trivial).
    # Boundary halo rows are clamped to a valid source row; their cv1 output
    # is zeroed below, so the clamped data never matters.
    def issue(strip, dst):
        row0 = strip * tile_h
        top = jnp.maximum(row0 - 1, 0)
        bot = jnp.minimum(row0 + tile_h, img_h - 1)
        pltpu.make_async_copy(x_hbm.at[nn, pl.ds(row0, tile_h)],
                              xin_ref.at[dst, pl.ds(1, tile_h)],
                              sem.at[dst, 0]).start()
        pltpu.make_async_copy(x_hbm.at[nn, pl.ds(top, 1)],
                              xin_ref.at[dst, pl.ds(0, 1)],
                              sem.at[dst, 1]).start()
        pltpu.make_async_copy(x_hbm.at[nn, pl.ds(bot, 1)],
                              xin_ref.at[dst, pl.ds(tile_h + 1, 1)],
                              sem.at[dst, 2]).start()

    def wait(dst):
        pltpu.make_async_copy(x_hbm.at[nn, pl.ds(0, tile_h)],
                              xin_ref.at[dst, pl.ds(1, tile_h)],
                              sem.at[dst, 0]).wait()
        pltpu.make_async_copy(x_hbm.at[nn, pl.ds(0, 1)],
                              xin_ref.at[dst, pl.ds(0, 1)],
                              sem.at[dst, 1]).wait()
        pltpu.make_async_copy(x_hbm.at[nn, pl.ds(0, 1)],
                              xin_ref.at[dst, pl.ds(tile_h + 1, 1)],
                              sem.at[dst, 2]).wait()

    # Prime the pipeline at the first strip of every image (the only step
    # whose DMA latency is exposed); afterwards the current strip was already
    # started by the previous grid step.
    @pl.when(r == 0)
    def _():
        issue(r, slot)

    # Prefetch the next strip into the other slot (overlaps this compute).
    @pl.when(r + 1 < n_strips)
    def _():
        issue(r + 1, 1 - slot)

    wait(slot)
    xin = xin_ref[slot]                                   # (tile_h+2, W, C)

    # ---- inner cv1: 1x1 conv + BN + SiLU on the haloed strip (VMEM only).
    y1 = jnp.dot(xin.reshape((tile_h + 2) * W, C), w1_ref[...],
                 preferred_element_type=jnp.float32)
    y1 = _silu(y1 * s1_ref[...] + b1_ref[...]).reshape(tile_h + 2, W, C)

    # Zero the halo rows that lie outside the image: PyTorch zero-pads the
    # cv1 *output* (cv2's input), so padding must be applied post-activation.
    row = jax.lax.broadcasted_iota(jnp.int32, (tile_h + 2, 1, 1), 0)
    outside = jnp.logical_or(
        jnp.logical_and(r == 0, row == 0),
        jnp.logical_and(r == n_strips - 1, row == tile_h + 1))
    y1 = jnp.where(outside, 0.0, y1).astype(xin.dtype)

    # ---- cv2: 3x3 conv as 9 accumulated matmuls (one per tap, K = C) over
    #      column-shifted views; no im2col buffer, f32 accumulation.
    zcol = jnp.zeros((tile_h + 2, 1, C), y1.dtype)
    y_l = jnp.concatenate([zcol, y1[:, :W - 1, :]], axis=1)   # col j -> y1[j-1]
    y_r = jnp.concatenate([y1[:, 1:, :], zcol], axis=1)       # col j -> y1[j+1]
    shifted = (y_l, y1, y_r)
    acc = None
    for ky in range(3):
        for kx in range(3):
            tap = shifted[kx][ky:ky + tile_h].reshape(tile_h * W, C)
            d = jnp.dot(tap, w2_ref[ky * 3 + kx],
                        preferred_element_type=jnp.float32)
            acc = d if acc is None else acc + d
    y2 = _silu(acc * s2_ref[...] + b2_ref[...])

    if add:   # residual: un-haloed input strip is already resident in VMEM
        y2 = y2 + xin[1:tile_h + 1].reshape(tile_h * W, C).astype(jnp.float32)

    o_ref[...] = y2.reshape(1, tile_h, W, C2).astype(o_ref.dtype)


def _choose_tile_h(H, W, C, C2, itemsize, budget_bytes=None):
    """Largest divisor of H whose working set fits the VMEM budget.

    Accounts for the double-buffered input strips, the f32 temporaries
    (cv1 result, accumulator, residual upcast), the shifted views, the
    double-buffered output block and the resident weights, with a 1.5x
    safety factor on top.
    """
    if budget_bytes is None:
        budget_bytes = _TILE_BUDGET_BYTES
    divisors = [t for t in range(1, H + 1) if H % t == 0]
    best = divisors[0]
    for t in divisors:
        halo = (t + 2) * W * C
        body = t * W
        need = (2 * halo * itemsize            # double-buffered haloed input
                + halo * 4                     # f32 cv1 result
                + 3 * halo * itemsize          # y1 + two column-shifted views
                + 2 * body * C2 * 4            # f32 accumulator (+ dot temp)
                + body * C * 4                 # residual upcast temp
                + 2 * body * C2 * itemsize     # double-buffered output block
                + (C * C + 9 * C * C2 + 4 * (C + C2)) * itemsize)
        if int(need * 1.5) <= budget_bytes:
            best = t
    return best


def bottleneck_fused(x_nhwc, w1, s1, b1, w2_taps, s2, b2, *, add, tile_h=None):
    N, H, W, C = x_nhwc.shape
    C2 = w2_taps.shape[-1]
    itemsize = jnp.dtype(x_nhwc.dtype).itemsize
    if tile_h is None:
        tile_h = _choose_tile_h(H, W, C, C2, itemsize)
    assert H % tile_h == 0, (H, tile_h)
    n_strips = H // tile_h
    kernel = functools.partial(_bottleneck_kernel, add=add, tile_h=tile_h,
                               n_strips=n_strips, img_h=H)
    return pl.pallas_call(
        kernel,
        out_shape=jax.ShapeDtypeStruct((N, H, W, C2), x_nhwc.dtype),
        grid=(N, n_strips),
        in_specs=[
            pl.BlockSpec(memory_space=pl.ANY),                    # x in HBM
            pl.BlockSpec((C, C), lambda nn, r: (0, 0)),           # w1 resident
            pl.BlockSpec((1, C), lambda nn, r: (0, 0)),           # s1
            pl.BlockSpec((1, C), lambda nn, r: (0, 0)),           # b1
            pl.BlockSpec((9, C, C2), lambda nn, r: (0, 0, 0)),    # w2 per-tap
            pl.BlockSpec((1, C2), lambda nn, r: (0, 0)),          # s2
            pl.BlockSpec((1, C2), lambda nn, r: (0, 0)),          # b2
        ],
        out_specs=pl.BlockSpec((1, tile_h, W, C2),
                               lambda nn, r: (nn, r, 0, 0)),
        scratch_shapes=[
            pltpu.VMEM((2, tile_h + 2, W, C), x_nhwc.dtype),      # 2-slot strip
            pltpu.SemaphoreType.DMA((2, 3)),
        ],
        compiler_params=pltpu.CompilerParams(
            # Strip axis is "arbitrary" so the manual prefetch chain is never
            # split across TensorCores; the batch axis stays megacore-able.
            dimension_semantics=("parallel", "arbitrary"),
            vmem_limit_bytes=_VMEM_LIMIT_BYTES),
    )(x_nhwc, w1,
      s1.reshape(1, C).astype(jnp.float32), b1.reshape(1, C).astype(jnp.float32),
      w2_taps,
      s2.reshape(1, C2).astype(jnp.float32), b2.reshape(1, C2).astype(jnp.float32))


# ---------------------------------------------------------------------------
# C2f forward (Pallas) — accepts NCHW like the PyTorch module.
# ---------------------------------------------------------------------------
def c2f_forward(x_nchw, p, *, shortcut=False, bn_tile_h=None,
                compute_dtype=None):
    # compute_dtype=jnp.bfloat16 halves HBM traffic / doubles MXU rate on
    # v6e/v7x (accumulation and BN/SiLU epilogue stay f32); default keeps the
    # input dtype so the f32 test is bit-faithful.
    orig_dtype = x_nchw.dtype
    cdt = compute_dtype or orig_dtype
    N, C1, H, W = x_nchw.shape
    c = p['c']
    c2 = p['cv2']['w'].shape[0]

    x = jnp.transpose(x_nchw, (0, 2, 3, 1)).astype(cdt)     # single NHWC transpose
    M = N * H * W

    # ---- C2f.cv1 : 1x1, C1 -> 2c, emitted directly as (x1, x2)
    w = p['cv1']['w'][:, :, 0, 0].T                          # (C1, 2c)
    s, b = fold_bn(p['cv1'])
    x1, x2 = pointwise_conv_bn_silu([x.reshape(M, C1)], w, s, b,
                                    out_splits=[c, c])

    # ---- n fused Bottlenecks on the running tail
    cur = x2.reshape(N, H, W, c)
    branches = [x1, x2]
    for bp in p['m']:
        w1 = bp['cv1']['w'][:, :, 0, 0].T.astype(cdt)                        # (c, c)
        s1, b1 = fold_bn(bp['cv1'])
        # (cout, cin, 3, 3) -> (kh, kw, cin, cout) -> (9, cin, cout)
        w2 = jnp.transpose(bp['cv2']['w'], (2, 3, 1, 0)).reshape(9, c, c).astype(cdt)
        s2, b2 = fold_bn(bp['cv2'])
        cur = bottleneck_fused(cur, w1, s1, b1, w2, s2, b2,
                               add=bool(shortcut), tile_h=bn_tile_h)
        branches.append(cur.reshape(M, c))

    # ---- C2f.cv2 : 1x1 over concat([x1, x2, m1..mn]); concat fused away
    w = p['cv2']['w'][:, :, 0, 0].T                          # ((2+n)c, c2)
    s, b = fold_bn(p['cv2'])
    out2d = pointwise_conv_bn_silu(branches, w, s, b)        # (M, c2)

    out = out2d.reshape(N, H, W, c2)
    return jnp.transpose(out, (0, 3, 1, 2)).astype(orig_dtype)   # back to NCHW


# ---------------------------------------------------------------------------
# Deterministic parameters + pure-JAX reference
# ---------------------------------------------------------------------------
def _conv_bn_params(key, cout, cin, k):
    ks = jax.random.split(key, 5)
    return {
        'w': 0.2 * jax.random.normal(ks[0], (cout, cin, k, k), jnp.float32),
        'g': 1.0 + 0.1 * jax.random.normal(ks[1], (cout,), jnp.float32),
        'b': 0.1 * jax.random.normal(ks[2], (cout,), jnp.float32),
        'm': 0.1 * jax.random.normal(ks[3], (cout,), jnp.float32),
        'v': jax.random.uniform(ks[4], (cout,), jnp.float32, 0.5, 1.5),
    }


def make_params(key, c1, c2, n=1, e=0.5):
    c = int(c2 * e)
    keys = jax.random.split(key, 2 + 2 * n)
    p = {'c': c,
         'cv1': _conv_bn_params(keys[0], 2 * c, c1, 1),
         'cv2': _conv_bn_params(keys[1], c2, (2 + n) * c, 1),
         'm': []}
    for i in range(n):
        p['m'].append({
            'cv1': _conv_bn_params(keys[2 + 2 * i], c, c, 1),
            'cv2': _conv_bn_params(keys[3 + 2 * i], c, c, 3),
        })
    return p


def _conv_bn_silu_ref(x, cp, pad):
    y = jax.lax.conv_general_dilated(
        x, cp['w'], (1, 1), [(pad, pad), (pad, pad)],
        dimension_numbers=('NCHW', 'OIHW', 'NCHW'))
    s, b = fold_bn(cp)
    y = y * s[None, :, None, None] + b[None, :, None, None]
    return _silu(y)


def c2f_reference(x, p, shortcut=False):
    y = _conv_bn_silu_ref(x, p['cv1'], 0)
    c = p['c']
    ys = [y[:, :c], y[:, c:]]
    cur = y[:, c:]
    for bp in p['m']:
        t = _conv_bn_silu_ref(cur, bp['cv1'], 0)
        t = _conv_bn_silu_ref(t, bp['cv2'], 1)
        cur = cur + t if shortcut else t
        ys.append(cur)
    return _conv_bn_silu_ref(jnp.concatenate(ys, 1), p['cv2'], 0)


if __name__ == "__main__":
    N, C1, C2, H, W, NB = 2, 8, 8, 16, 16, 1
    key = jax.random.PRNGKey(0)
    k_x, k_p = jax.random.split(key)
    x = jax.random.normal(k_x, (N, C1, H, W), jnp.float32)
    params = make_params(k_p, C1, C2, n=NB, e=0.5)

    # Exercise both the multi-strip path (tile_h=4 -> halo DMAs + steady-state
    # double-buffered prefetch across strip boundaries) and the auto-tiled
    # single-strip path, with shortcut=False (module default) and
    # shortcut=True (residual add).
    for shortcut, tile_h in ((False, 4), (True, None)):
        out = jax.block_until_ready(
            c2f_forward(x, params, shortcut=shortcut, bn_tile_h=tile_h))
        ref = jax.block_until_ready(c2f_reference(x, params, shortcut=shortcut))
        assert out.shape == (N, C2, H, W), out.shape
        # Tolerance covers MXU vs XLA-conv f32 precision differences.
        assert jnp.allclose(out, ref, atol=1e-2, rtol=1e-2), float(
            jnp.max(jnp.abs(out - ref)))

    print("KERNEL_OK")
</pallas_src>

<mosaic_0001>
module attributes {stable_mosaic.version = 11 : i64} {
  func.func @_pw_conv_kernel(%arg0: i32, %arg1: memref<512x8xf32, #tpu.memory_space<vmem>>, %arg2: memref<8x4xf32, #tpu.memory_space<vmem>>, %arg3: memref<8x4xf32, #tpu.memory_space<vmem>>, %arg4: memref<1x4xf32, #tpu.memory_space<vmem>>, %arg5: memref<1x4xf32, #tpu.memory_space<vmem>>, %arg6: memref<1x4xf32, #tpu.memory_space<vmem>>, %arg7: memref<1x4xf32, #tpu.memory_space<vmem>>, %arg8: memref<512x4xf32, #tpu.memory_space<vmem>>, %arg9: memref<512x4xf32, #tpu.memory_space<vmem>>) attributes {dimension_semantics = [#tpu.dimension_semantics<parallel>], iteration_bounds = array<i64: 1>, scalar_prefetch = 0 : i64, scratch_operands = 0 : i64, tpu.core_type = #tpu.core_type<tc>, window_params = [{transform_indices = @transform_0, window_bounds = array<i64: 512, 8>}, {pipeline_mode = #tpu.pipeline_mode<synchronous>, transform_indices = @transform_1, window_bounds = array<i64: 8, 4>}, {pipeline_mode = #tpu.pipeline_mode<synchronous>, transform_indices = @transform_2, window_bounds = array<i64: 8, 4>}, {pipeline_mode = #tpu.pipeline_mode<synchronous>, transform_indices = @transform_3, window_bounds = array<i64: 1, 4>}, {pipeline_mode = #tpu.pipeline_mode<synchronous>, transform_indices = @transform_4, window_bounds = array<i64: 1, 4>}, {pipeline_mode = #tpu.pipeline_mode<synchronous>, transform_indices = @transform_5, window_bounds = array<i64: 1, 4>}, {pipeline_mode = #tpu.pipeline_mode<synchronous>, transform_indices = @transform_6, window_bounds = array<i64: 1, 4>}, {transform_indices = @transform_7, window_bounds = array<i64: 512, 4>}, {transform_indices = @transform_8, window_bounds = array<i64: 512, 4>}]} {
    %c0 = arith.constant 0 : index
    %c0_0 = arith.constant 0 : index
    %0 = vector.load %arg1[%c0, %c0_0] : memref<512x8xf32, #tpu.memory_space<vmem>>, vector<512x8xf32>
    %c0_1 = arith.constant 0 : index
    %c0_2 = arith.constant 0 : index
    %1 = vector.load %arg2[%c0_1, %c0_2] : memref<8x4xf32, #tpu.memory_space<vmem>>, vector<8x4xf32>
    %cst = arith.constant dense<0.000000e+00> : vector<512x4xf32>
    %2 = tpu.matmul %0, %1, %cst {dimension_numbers = #tpu.dot_dimension_numbers<[1], [0], [0], [1], [0, 0, 1, 1], [], []>} : vector<512x8xf32>, vector<8x4xf32>, vector<512x4xf32> -> vector<512x4xf32>
    %c0_3 = arith.constant 0 : index
    %c0_4 = arith.constant 0 : index
    %3 = vector.load %arg4[%c0_3, %c0_4] : memref<1x4xf32, #tpu.memory_space<vmem>>, vector<1x4xf32>
    %4 = vector.broadcast %3 : vector<1x4xf32> to vector<512x4xf32>
    %5 = arith.mulf %2, %4 : vector<512x4xf32>
    %c0_5 = arith.constant 0 : index
    %c0_6 = arith.constant 0 : index
    %6 = vector.load %arg6[%c0_5, %c0_6] : memref<1x4xf32, #tpu.memory_space<vmem>>, vector<1x4xf32>
    %7 = vector.broadcast %6 : vector<1x4xf32> to vector<512x4xf32>
    %8 = arith.addf %5, %7 : vector<512x4xf32>
    %9 = arith.negf %8 : vector<512x4xf32>
    %10 = math.exp %9 : vector<512x4xf32>
    %cst_7 = arith.constant 1.000000e+00 : f32
    %11 = vector.broadcast %cst_7 : f32 to vector<512x4xf32>
    %12 = arith.addf %11, %10 : vector<512x4xf32>
    %13 = arith.divf %11, %12 : vector<512x4xf32>
    %14 = arith.mulf %8, %13 : vector<512x4xf32>
    %c0_8 = arith.constant 0 : index
    %c0_9 = arith.constant 0 : index
    %15 = vector.load %arg8[%c0_8, %c0_9] : memref<512x4xf32, #tpu.memory_space<vmem>>, vector<512x4xf32>
    tpu.vector_store %arg8[%c0_8, %c0_9], %14 {strides = array<i32>} : memref<512x4xf32, #tpu.memory_space<vmem>>, vector<512x4xf32>,
    %c0_10 = arith.constant 0 : index
    %c0_11 = arith.constant 0 : index
    %16 = vector.load %arg1[%c0_10, %c0_11] : memref<512x8xf32, #tpu.memory_space<vmem>>, vector<512x8xf32>
    %c0_12 = arith.constant 0 : index
    %c0_13 = arith.constant 0 : index
    %17 = vector.load %arg3[%c0_12, %c0_13] : memref<8x4xf32, #tpu.memory_space<vmem>>, vector<8x4xf32>
    %cst_14 = arith.constant dense<0.000000e+00> : vector<512x4xf32>
    %18 = tpu.matmul %16, %17, %cst_14 {dimension_numbers = #tpu.dot_dimension_numbers<[1], [0], [0], [1], [0, 0, 1, 1], [], []>} : vector<512x8xf32>, vector<8x4xf32>, vector<512x4xf32> -> vector<512x4xf32>
    %c0_15 = arith.constant 0 : index
    %c0_16 = arith.constant 0 : index
    %19 = vector.load %arg5[%c0_15, %c0_16] : memref<1x4xf32, #tpu.memory_space<vmem>>, vector<1x4xf32>
    %20 = vector.broadcast %19 : vector<1x4xf32> to vector<512x4xf32>
    %21 = arith.mulf %18, %20 : vector<512x4xf32>
    %c0_17 = arith.constant 0 : index
    %c0_18 = arith.constant 0 : index
    %22 = vector.load %arg7[%c0_17, %c0_18] : memref<1x4xf32, #tpu.memory_space<vmem>>, vector<1x4xf32>
    %23 = vector.broadcast %22 : vector<1x4xf32> to vector<512x4xf32>
    %24 = arith.addf %21, %23 : vector<512x4xf32>
    %25 = arith.negf %24 : vector<512x4xf32>
    %26 = math.exp %25 : vector<512x4xf32>
    %cst_19 = arith.constant 1.000000e+00 : f32
    %27 = vector.broadcast %cst_19 : f32 to vector<512x4xf32>
    %28 = arith.addf %27, %26 : vector<512x4xf32>
    %29 = arith.divf %27, %28 : vector<512x4xf32>
    %30 = arith.mulf %24, %29 : vector<512x4xf32>
    %c0_20 = arith.constant 0 : index
    %c0_21 = arith.constant 0 : index
    %31 = vector.load %arg9[%c0_20, %c0_21] : memref<512x4xf32, #tpu.memory_space<vmem>>, vector<512x4xf32>
    tpu.vector_store %arg9[%c0_20, %c0_21], %30 {strides = array<i32>} : memref<512x4xf32, #tpu.memory_space<vmem>>, vector<512x4xf32>,
    return
  }
  func.func @transform_0(%arg0: i32) -> (i32, i32) {
    %c0_i32 = arith.constant 0 : i32
    %c0_i32_0 = arith.constant 0 : i32
    return %arg0, %c0_i32 : i32, i32
  }
  func.func @transform_1(%arg0: i32) -> (i32, i32) {
    %c0_i32 = arith.constant 0 : i32
    %c0_i32_0 = arith.constant 0 : i32
    %c0_i32_1 = arith.constant 0 : i32
    return %c0_i32, %c0_i32_0 : i32, i32
  }
  func.func @transform_2(%arg0: i32) -> (i32, i32) {
    %c0_i32 = arith.constant 0 : i32
    %c0_i32_0 = arith.constant 0 : i32
    %c0_i32_1 = arith.constant 0 : i32
    return %c0_i32, %c0_i32_0 : i32, i32
  }
  func.func @transform_3(%arg0: i32) -> (i32, i32) {
    %c0_i32 = arith.constant 0 : i32
    %c0_i32_0 = arith.constant 0 : i32
    %c0_i32_1 = arith.constant 0 : i32
    return %c0_i32, %c0_i32_0 : i32, i32
  }
  func.func @transform_4(%arg0: i32) -> (i32, i32) {
    %c0_i32 = arith.constant 0 : i32
    %c0_i32_0 = arith.constant 0 : i32
    %c0_i32_1 = arith.constant 0 : i32
    return %c0_i32, %c0_i32_0 : i32, i32
  }
  func.func @transform_5(%arg0: i32) -> (i32, i32) {
    %c0_i32 = arith.constant 0 : i32
    %c0_i32_0 = arith.constant 0 : i32
    %c0_i32_1 = arith.constant 0 : i32
    return %c0_i32, %c0_i32_0 : i32, i32
  }
  func.func @transform_6(%arg0: i32) -> (i32, i32) {
    %c0_i32 = arith.constant 0 : i32
    %c0_i32_0 = arith.constant 0 : i32
    %c0_i32_1 = arith.constant 0 : i32
    return %c0_i32, %c0_i32_0 : i32, i32
  }
  func.func @transform_7(%arg0: i32) -> (i32, i32) {
    %c0_i32 = arith.constant 0 : i32
    %c0_i32_0 = arith.constant 0 : i32
    return %arg0, %c0_i32 : i32, i32
  }
  func.func @transform_8(%arg0: i32) -> (i32, i32) {
    %c0_i32 = arith.constant 0 : i32
    %c0_i32_0 = arith.constant 0 : i32
    return %arg0, %c0_i32 : i32, i32
  }
}

</mosaic_0001>

<llo_original>
// kernel: tpu_custom_call.1
$region0: #{tpu_custom_call.1}
  #allocation0 [shape = 'u32[]', space=smem, size = 0x4, offset = 0x4, fixed_abs, tag = 'smem constant byte address 0x4 - core index']
  #allocation1 [shape = 'u32[144,128]{1,0:T(1,128)}', space=vmem, size = 0x12000, scoped, tag = 'internal scratch']
  %s0 = inlined_call_operand.vmem [shape: f32[512,8], index: 0, kind: input, shape index: {}]
  %s1 = inlined_call_operand.vmem [shape: f32[8,4], index: 1, kind: input, shape index: {}]
  %s2 = inlined_call_operand.vmem [shape: f32[8,4], index: 2, kind: input, shape index: {}]
  %s3 = inlined_call_operand.vmem [shape: f32[1,4], index: 3, kind: input, shape index: {}]
  %s4 = inlined_call_operand.vmem [shape: f32[1,4], index: 4, kind: input, shape index: {}]
  %s5 = inlined_call_operand.vmem [shape: f32[1,4], index: 5, kind: input, shape index: {}]
  %s6 = inlined_call_operand.vmem [shape: f32[1,4], index: 6, kind: input, shape index: {}]
  %s7 = inlined_call_operand.vmem [shape: f32[512,4], index: 7, kind: output, shape index: {0}]
  %s8 = inlined_call_operand.vmem [shape: f32[512,4], index: 8, kind: output, shape index: {1}]
  %9 = xla_tuple %s7, %s8
  %s10 = sld [smem:[#allocation0]]
  $region46: #{tpu_custom_call.1} parent=0
    _
  %s12 = ssub.s32 1, %s10
  %s13 = scalar_select 0, %s12, %s10
  // Predicated region
  $region2: #{tpu_custom_call.1} parent=0 // pred_check
    _
  $region3: #{tpu_custom_call.1} parent=0 // pred_check_branch
    %15 = sbr.rel (0) target = $region5
  $region4: #{tpu_custom_call.1} parent=0 // pred_region
    _
  $region5: #{tpu_custom_call.1} parent=0 // pred_fallthru
    _
  // Predicated region
  $region6: #{tpu_custom_call.1} parent=0 // pred_check
    _
  $region7: #{tpu_custom_call.1} parent=0 // pred_check_branch
    %17 = sbr.rel (0) target = $region9
  $region8: #{tpu_custom_call.1} parent=0 // pred_region
    _
  $region9: #{tpu_custom_call.1} parent=0 // pred_fallthru
    _
  // Predicated region
  $region10: #{tpu_custom_call.1} parent=0 // pred_check
    _
  $region11: #{tpu_custom_call.1} parent=0 // pred_check_branch
    %19 = sbr.rel (0) target = $region13
  $region12: #{tpu_custom_call.1} parent=0 // pred_region
    _
  $region13: #{tpu_custom_call.1} parent=0 // pred_fallthru
    _
  // Predicated region
  $region14: #{tpu_custom_call.1} parent=0 // pred_check
    _
  $region15: #{tpu_custom_call.1} parent=0 // pred_check_branch
    %21 = sbr.rel (0) target = $region17
  $region16: #{tpu_custom_call.1} parent=0 // pred_region
    _
  $region17: #{tpu_custom_call.1} parent=0 // pred_fallthru
    _
  // Predicated region
  $region18: #{tpu_custom_call.1} parent=0 // pred_check
    _
  $region19: #{tpu_custom_call.1} parent=0 // pred_check_branch
    %23 = sbr.rel (0) target = $region21
  $region20: #{tpu_custom_call.1} parent=0 // pred_region
    _
  $region21: #{tpu_custom_call.1} parent=0 // pred_fallthru
    _
  // Predicated region
  $region22: #{tpu_custom_call.1} parent=0 // pred_check
    _
  $region23: #{tpu_custom_call.1} parent=0 // pred_check_branch
    %25 = sbr.rel (0) target = $region25
  $region24: #{tpu_custom_call.1} parent=0 // pred_region
    _
  $region25: #{tpu_custom_call.1} parent=0 // pred_fallthru
    _
  // Predicated region
  $region26: #{tpu_custom_call.1} parent=0 // pred_check
    _
  $region27: #{tpu_custom_call.1} parent=0 // pred_check_branch
    %27 = sbr.rel (0) target = $region29
  $region28: #{tpu_custom_call.1} parent=0 // pred_region
    _
  $region29: #{tpu_custom_call.1} parent=0 // pred_fallthru
    _
  %v28 = vld [vmem:[%s0] sm:$0xff]
  %v29 = vld [vmem:[%s0 + $0x8] sm:$0xff]
  %v30 = vld [vmem:[%s0 + $0x10] sm:$0xff]
  %v31 = vld [vmem:[%s0 + $0x18] sm:$0xff]
  %v32 = vld [vmem:[%s0 + $0x20] sm:$0xff]
  %v33 = vld [vmem:[%s0 + $0x28] sm:$0xff]
  %v34 = vld [vmem:[%s0 + $0x30] sm:$0xff]
  %v35 = vld [vmem:[%s0 + $0x38] sm:$0xff]
  %v36 = vld [vmem:[%s0 + $0x40] sm:$0xff]
  %v37 = vld [vmem:[%s0 + $0x48] sm:$0xff]
  %v38 = vld [vmem:[%s0 + $0x50] sm:$0xff]
  %v39 = vld [vmem:[%s0 + $0x58] sm:$0xff]
  %v40 = vld [vmem:[%s0 + $0x60] sm:$0xff]
  %v41 = vld [vmem:[%s0 + $0x68] sm:$0xff]
  %v42 = vld [vmem:[%s0 + $0x70] sm:$0xff]
  %v43 = vld [vmem:[%s0 + $0x78] sm:$0xff]
  %v44 = vld [vmem:[%s0 + $0x80] sm:$0xff]
  %v45 = vld [vmem:[%s0 + $0x88] sm:$0xff]
  %v46 = vld [vmem:[%s0 + $0x90] sm:$0xff]
  %v47 = vld [vmem:[%s0 + $0x98] sm:$0xff]
  %v48 = vld [vmem:[%s0 + $0xa0] sm:$0xff]
  %v49 = vld [vmem:[%s0 + $0xa8] sm:$0xff]
  %v50 = vld [vmem:[%s0 + $0xb0] sm:$0xff]
  %v51 = vld [vmem:[%s0 + $0xb8] sm:$0xff]
  %v52 = vld [vmem:[%s0 + $0xc0] sm:$0xff]
  %v53 = vld [vmem:[%s0 + $0xc8] sm:$0xff]
  %v54 = vld [vmem:[%s0 + $0xd0] sm:$0xff]
  %v55 = vld [vmem:[%s0 + $0xd8] sm:$0xff]
  %v56 = vld [vmem:[%s0 + $0xe0] sm:$0xff]
  %v57 = vld [vmem:[%s0 + $0xe8] sm:$0xff]
  %v58 = vld [vmem:[%s0 + $0xf0] sm:$0xff]
  %v59 = vld [vmem:[%s0 + $0xf8] sm:$0xff]
  %v60 = vld [vmem:[%s0 + $0x100] sm:$0xff]
  %v61 = vld [vmem:[%s0 + $0x108] sm:$0xff]
  %v62 = vld [vmem:[%s0 + $0x110] sm:$0xff]
  %v63 = vld [vmem:[%s0 + $0x118] sm:$0xff]
  %v64 = vld [vmem:[%s0 + $0x120] sm:$0xff]
  %v65 = vld [vmem:[%s0 + $0x128] sm:$0xff]
  %v66 = vld [vmem:[%s0 + $0x130] sm:$0xff]
  %v67 = vld [vmem:[%s0 + $0x138] sm:$0xff]
  %v68 = vld [vmem:[%s0 + $0x140] sm:$0xff]
  %v69 = vld [vmem:[%s0 + $0x148] sm:$0xff]
  %v70 = vld [vmem:[%s0 + $0x150] sm:$0xff]
  %v71 = vld [vmem:[%s0 + $0x158] sm:$0xff]
  %v72 = vld [vmem:[%s0 + $0x160] sm:$0xff]
  %v73 = vld [vmem:[%s0 + $0x168] sm:$0xff]
  %v74 = vld [vmem:[%s0 + $0x170] sm:$0xff]
  %v75 = vld [vmem:[%s0 + $0x178] sm:$0xff]
  %v76 = vld [vmem:[%s0 + $0x180] sm:$0xff]
  %v77 = vld [vmem:[%s0 + $0x188] sm:$0xff]
  %v78 = vld [vmem:[%s0 + $0x190] sm:$0xff]
  %v79 = vld [vmem:[%s0 + $0x198] sm:$0xff]
  %v80 = vld [vmem:[%s0 + $0x1a0] sm:$0xff]
  %v81 = vld [vmem:[%s0 + $0x1a8] sm:$0xff]
  %v82 = vld [vmem:[%s0 + $0x1b0] sm:$0xff]
  %v83 = vld [vmem:[%s0 + $0x1b8] sm:$0xff]
  %v84 = vld [vmem:[%s0 + $0x1c0] sm:$0xff]
  %v85 = vld [vmem:[%s0 + $0x1c8] sm:$0xff]
  %v86 = vld [vmem:[%s0 + $0x1d0] sm:$0xff]
  %v87 = vld [vmem:[%s0 + $0x1d8] sm:$0xff]
  %v88 = vld [vmem:[%s0 + $0x1e0] sm:$0xff]
  %v89 = vld [vmem:[%s0 + $0x1e8] sm:$0xff]
  %v90 = vld [vmem:[%s0 + $0x1f0] sm:$0xff]
  %v91 = vld [vmem:[%s0 + $0x1f8] sm:$0xff]
  %v92 = vld [vmem:[%s1] sm:$0xff]
  %vm93 = vcmask 64512
  %v95 = vsel %vm93, %v28, 0
  %v98 = vsel %vm93, %v29, 0
  %v101 = vsel %vm93, %v30, 0
  %v104 = vsel %vm93, %v31, 0
  %v107 = vsel %vm93, %v32, 0
  %v110 = vsel %vm93, %v33, 0
  %v113 = vsel %vm93, %v34, 0
  %v116 = vsel %vm93, %v35, 0
  %v119 = vsel %vm93, %v36, 0
  %v122 = vsel %vm93, %v37, 0
  %v125 = vsel %vm93, %v38, 0
  %v128 = vsel %vm93, %v39, 0
  %v131 = vsel %vm93, %v40, 0
  %v134 = vsel %vm93, %v41, 0
  %v137 = vsel %vm93, %v42, 0
  %v140 = vsel %vm93, %v43, 0
  %v143 = vsel %vm93, %v44, 0
  %v146 = vsel %vm93, %v45, 0
  %v149 = vsel %vm93, %v46, 0
  %v152 = vsel %vm93, %v47, 0
  %v155 = vsel %vm93, %v48, 0
  %v158 = vsel %vm93, %v49, 0
  %v161 = vsel %vm93, %v50, 0
  %v164 = vsel %vm93, %v51, 0
  %v167 = vsel %vm93, %v52, 0
  %v170 = vsel %vm93, %v53, 0
  %v173 = vsel %vm93, %v54, 0
  %v176 = vsel %vm93, %v55, 0
  %v179 = vsel %vm93, %v56, 0
  %v182 = vsel %vm93, %v57, 0
  %v185 = vsel %vm93, %v58, 0
  %v188 = vsel %vm93, %v59, 0
  %v191 = vsel %vm93, %v60, 0
  %v194 = vsel %vm93, %v61, 0
  %v197 = vsel %vm93, %v62, 0
  %v200 = vsel %vm93, %v63, 0
  %v203 = vsel %vm93, %v64, 0
  %v206 = vsel %vm93, %v65, 0
  %v209 = vsel %vm93, %v66, 0
  %v212 = vsel %vm93, %v67, 0
  %v215 = vsel %vm93, %v68, 0
  %v218 = vsel %vm93, %v69, 0
  %v221 = vsel %vm93, %v70, 0
  %v224 = vsel %vm93, %v71, 0
  %v227 = vsel %vm93, %v72, 0
  %v230 = vsel %vm93, %v73, 0
  %v233 = vsel %vm93, %v74, 0
  %v236 = vsel %vm93, %v75, 0
  %v239 = vsel %vm93, %v76, 0
  %v242 = vsel %vm93, %v77, 0
  %v245 = vsel %vm93, %v78, 0
  %v248 = vsel %vm93, %v79, 0
  %v251 = vsel %vm93, %v80, 0
  %v254 = vsel %vm93, %v81, 0
  %v257 = vsel %vm93, %v82, 0
  %v260 = vsel %vm93, %v83, 0
  %v263 = vsel %vm93, %v84, 0
  %v266 = vsel %vm93, %v85, 0
  %v269 = vsel %vm93, %v86, 0
  %v272 = vsel %vm93, %v87, 0
  %v275 = vsel %vm93, %v88, 0
  %v278 = vsel %vm93, %v89, 0
  %v281 = vsel %vm93, %v90, 0
  %v284 = vsel %vm93, %v91, 0
  %286 = vmatprep.subr.mxu0 0.0
  %287 = vmatpush1.msra.mxu0 %v92
  %288 = vmatprep.subr.mxu0 0.0
  %289 = vmatpush1.msra.mxu0 0.0
  %290 = vmatprep.subr.mxu0 0.0
  %291 = vmatpush1.msra.mxu0 0.0
  %292 = vmatprep.subr.mxu0 0.0
  %293 = vmatpush1.msra.mxu0 0.0
  %294 = vmatprep.subr.mxu0 0.0
  %295 = vmatpush1.msra.mxu0 0.0
  %296 = vmatprep.subr.mxu0 0.0
  %297 = vmatpush1.msra.mxu0 0.0
  %298 = vmatprep.subr.mxu0 0.0
  %299 = vmatpush1.msra.mxu0 0.0
  %300 = vmatprep.subr.mxu0 0.0
  %301 = vmatpush1.msra.mxu0 0.0
  %302 = vmatprep.subr.mxu0 0.0
  %303 = vmatpush1.msra.mxu0 0.0
  %304 = vmatprep.subr.mxu0 0.0
  %305 = vmatpush1.msra.mxu0 0.0
  %306 = vmatprep.subr.mxu0 0.0
  %307 = vmatpush1.msra.mxu0 0.0
  %308 = vmatprep.subr.mxu0 0.0
  %309 = vmatpush1.msra.mxu0 0.0
  %310 = vmatprep.subr.mxu0 0.0
  %311 = vmatpush1.msra.mxu0 0.0
  %312 = vmatprep.subr.mxu0 0.0
  %313 = vmatpush1.msra.mxu0 0.0
  %314 = vmatprep.subr.mxu0 0.0
  %315 = vmatpush1.msra.mxu0 0.0
  %316 = vmatprep.subr.mxu0 0.0
  %317 = vmatpush1.msra.mxu0 0.0
  %318 = vmatprep.subr.mxu0 0.0
  %319 = vmatpush1.msra.mxu0 0.0
  %320 = vmatprep.subr.mxu0 0.0
  %321 = vmatpush1.msra.mxu0 0.0
  %322 = vmatprep.subr.mxu0 0.0
  %323 = vmatpush1.msra.mxu0 0.0
  %324 = vmatprep.subr.mxu0 0.0
  %325 = vmatpush1.msra.mxu0 0.0
  %326 = vmatprep.subr.mxu0 0.0
  %327 = vmatpush1.msra.mxu0 0.0
  %328 = vmatprep.subr.mxu0 0.0
  %329 = vmatpush1.msra.mxu0 0.0
  %330 = vmatprep.subr.mxu0 0.0
  %331 = vmatpush1.msra.mxu0 0.0
  %332 = vmatprep.subr.mxu0 0.0
  %333 = vmatpush1.msra.mxu0 0.0
  %334 = vmatprep.subr.mxu0 0.0
  %335 = vmatpush1.msra.mxu0 0.0
  %336 = vmatprep.subr.mxu0 0.0
  %337 = vmatpush1.msra.mxu0 0.0
  %338 = vmatprep.subr.mxu0 0.0
  %339 = vmatpush1.msra.mxu0 0.0
  %340 = vmatprep.subr.mxu0 0.0
  %341 = vmatpush1.msra.mxu0 0.0
  %342 = vmatprep.subr.mxu0 0.0
  %343 = vmatpush1.msra.mxu0 0.0
  %344 = vmatprep.subr.mxu0 0.0
  %345 = vmatpush1.msra.mxu0 0.0
  %346 = vmatprep.subr.mxu0 0.0
  %347 = vmatpush1.msra.mxu0 0.0
  %348 = vmatprep.subr.mxu0 0.0
  %349 = vmatpush1.msra.mxu0 0.0
  %350 = vmatprep.mubr.f32.mxu0 0.0
  %351 = vmatmul.mubr.f32.gmra.mrb[0].mxu0 %v95
  %v352 = vpop.f32.mrb[0].mxu0
  %v353 = vadd.f32 0.0, %v352
  %v354 = vpop.f32.mrb[0].mxu0
  %355 = vmatprep.mubr.f32.mxu0 0.0
  %356 = vmatmul.mubr.f32.gmra.mrb[0].mxu0 %v98
  %v357 = vpop.f32.mrb[0].mxu0
  %v358 = vadd.f32 0.0, %v357
  %v359 = vpop.f32.mrb[0].mxu0
  %360 = vmatprep.mubr.f32.mxu0 0.0
  %361 = vmatmul.mubr.f32.gmra.mrb[0].mxu0 %v101
  %v362 = vpop.f32.mrb[0].mxu0
  %v363 = vadd.f32 0.0, %v362
  %v364 = vpop.f32.mrb[0].mxu0
  %365 = vmatprep.mubr.f32.mxu0 0.0
  %366 = vmatmul.mubr.f32.gmra.mrb[0].mxu0 %v104
  %v367 = vpop.f32.mrb[0].mxu0
  %v368 = vadd.f32 0.0, %v367
  %v369 = vpop.f32.mrb[0].mxu0
  %370 = vmatprep.mubr.f32.mxu0 0.0
  %371 = vmatmul.mubr.f32.gmra.mrb[0].mxu0 %v107
  %v372 = vpop.f32.mrb[0].mxu0
  %v373 = vadd.f32 0.0, %v372
  %v374 = vpop.f32.mrb[0].mxu0
  %375 = vmatprep.mubr.f32.mxu0 0.0
  %376 = vmatmul.mubr.f32.gmra.mrb[0].mxu0 %v110
  %v377 = vpop.f32.mrb[0].mxu0
  %v378 = vadd.f32 0.0, %v377
  %v379 = vpop.f32.mrb[0].mxu0
  %380 = vmatprep.mubr.f32.mxu0 0.0
  %381 = vmatmul.mubr.f32.gmra.mrb[0].mxu0 %v113
  %v382 = vpop.f32.mrb[0].mxu0
  %v383 = vadd.f32 0.0, %v382
  %v384 = vpop.f32.mrb[0].mxu0
  %385 = vmatprep.mubr.f32.mxu0 0.0
  %386 = vmatmul.mubr.f32.gmra.mrb[0].mxu0 %v116
  %v387 = vpop.f32.mrb[0].mxu0
  %v388 = vadd.f32 0.0, %v387
  %v389 = vpop.f32.mrb[0].mxu0
  %390 = vmatprep.mubr.f32.mxu0 0.0
  %391 = vmatmul.mubr.f32.gmra.mrb[0].mxu0 %v119
  %v392 = vpop.f32.mrb[0].mxu0
  %v393 = vadd.f32 0.0, %v392
  %v394 = vpop.f32.mrb[0].mxu0
  %395 = vmatprep.mubr.f32.mxu0 0.0
  %396 = vmatmul.mubr.f32.gmra.mrb[0].mxu0 %v122
  %v397 = vpop.f32.mrb[0].mxu0
  %v398 = vadd.f32 0.0, %v397
  %v399 = vpop.f32.mrb[0].mxu0
  %400 = vmatprep.mubr.f32.mxu0 0.0
  %401 = vmatmul.mubr.f32.gmra.mrb[0].mxu0 %v125
  %v402 = vpop.f32.mrb[0].mxu0
  %v403 = vadd.f32 0.0, %v402
  %v404 = vpop.f32.mrb[0].mxu0
  %405 = vmatprep.mubr.f32.mxu0 0.0
  %406 = vmatmul.mubr.f32.gmra.mrb[0].mxu0 %v128
  %v407 = vpop.f32.mrb[0].mxu0
  %v408 = vadd.f32 0.0, %v407
  %v409 = vpop.f32.mrb[0].mxu0
  %410 = vmatprep.mubr.f32.mxu0 0.0
  %411 = vmatmul.mubr.f32.gmra.mrb[0].mxu0 %v131
  %v412 = vpop.f32.mrb[0].mxu0
  %v413 = vadd.f32 0.0, %v412
  %v414 = vpop.f32.mrb[0].mxu0
  %415 = vmatprep.mubr.f32.mxu0 0.0
  %416 = vmatmul.mubr.f32.gmra.mrb[0].mxu0 %v134
  %v417 = vpop.f32.mrb[0].mxu0
  %v418 = vadd.f32 0.0, %v417
  %v419 = vpop.f32.mrb[0].mxu0
  %420 = vmatprep.mubr.f32.mxu0 0.0
  %421 = vmatmul.mubr.f32.gmra.mrb[0].mxu0 %v137
  %v422 = vpop.f32.mrb[0].mxu0
  %v423 = vadd.f32 0.0, %v422
  %v424 = vpop.f32.mrb[0].mxu0
  %425 = vmatprep.mubr.f32.mxu0 0.0
  %426 = vmatmul.mubr.f32.gmra.mrb[0].mxu0 %v140
  %v427 = vpop.f32.mrb[0].mxu0
  %v428 = vadd.f32 0.0, %v427
  %v429 = vpop.f32.mrb[0].mxu0
  %430 = vmatprep.mubr.f32.mxu0 0.0
  %431 = vmatmul.mubr.f32.gmra.mrb[0].mxu0 %v143
  %v432 = vpop.f32.mrb[0].mxu0
  %v433 = vadd.f32 0.0, %v432
  %v434 = vpop.f32.mrb[0].mxu0
  %435 = vmatprep.mubr.f32.mxu0 0.0
  %436 = vmatmul.mubr.f32.gmra.mrb[0].mxu0 %v146
  %v437 = vpop.f32.mrb[0].mxu0
  %v438 = vadd.f32 0.0, %v437
  %v439 = vpop.f32.mrb[0].mxu0
  %440 = vmatprep.mubr.f32.mxu0 0.0
  %441 = vmatmul.mubr.f32.gmra.mrb[0].mxu0 %v149
  %v442 = vpop.f32.mrb[0].mxu0
  %v443 = vadd.f32 0.0, %v442
  %v444 = vpop.f32.mrb[0].mxu0
  %445 = vmatprep.mubr.f32.mxu0 0.0
  %446 = vmatmul.mubr.f32.gmra.mrb[0].mxu0 %v152
  %v447 = vpop.f32.mrb[0].mxu0
  %v448 = vadd.f32 0.0, %v447
  %v449 = vpop.f32.mrb[0].mxu0
  %450 = vmatprep.mubr.f32.mxu0 0.0
  %451 = vmatmul.mubr.f32.gmra.mrb[0].mxu0 %v155
  %v452 = vpop.f32.mrb[0].mxu0
  %v453 = vadd.f32 0.0, %v452
  %v454 = vpop.f32.mrb[0].mxu0
  %455 = vmatprep.mubr.f32.mxu0 0.0
  %456 = vmatmul.mubr.f32.gmra.mrb[0].mxu0 %v158
  %v457 = vpop.f32.mrb[0].mxu0
  %v458 = vadd.f32 0.0, %v457
  %v459 = vpop.f32.mrb[0].mxu0
  %460 = vmatprep.mubr.f32.mxu0 0.0
  %461 = vmatmul.mubr.f32.gmra.mrb[0].mxu0 %v161
  %v462 = vpop.f32.mrb[0].mxu0
  %v463 = vadd.f32 0.0, %v462
  %v464 = vpop.f32.mrb[0].mxu0
  %465 = vmatprep.mubr.f32.mxu0 0.0
  %466 = vmatmul.mubr.f32.gmra.mrb[0].mxu0 %v164
  %v467 = vpop.f32.mrb[0].mxu0
  %v468 = vadd.f32 0.0, %v467
  %v469 = vpop.f32.mrb[0].mxu0
  %470 = vmatprep.mubr.f32.mxu0 0.0
  %471 = vmatmul.mubr.f32.gmra.mrb[0].mxu0 %v167
  %v472 = vpop.f32.mrb[0].mxu0
  %v473 = vadd.f32 0.0, %v472
  %v474 = vpop.f32.mrb[0].mxu0
  %475 = vmatprep.mubr.f32.mxu0 0.0
  %476 = vmatmul.mubr.f32.gmra.mrb[0].mxu0 %v170
  %v477 = vpop.f32.mrb[0].mxu0
  %v478 = vadd.f32 0.0, %v477
  %v479 = vpop.f32.mrb[0].mxu0
  %480 = vmatprep.mubr.f32.mxu0 0.0
  %481 = vmatmul.mubr.f32.gmra.mrb[0].mxu0 %v173
  %v482 = vpop.f32.mrb[0].mxu0
  %v483 = vadd.f32 0.0, %v482
  %v484 = vpop.f32.mrb[0].mxu0
  %485 = vmatprep.mubr.f32.mxu0 0.0
  %486 = vmatmul.mubr.f32.gmra.mrb[0].mxu0 %v176
  %v487 = vpop.f32.mrb[0].mxu0
  %v488 = vadd.f32 0.0, %v487
  %v489 = vpop.f32.mrb[0].mxu0
  %490 = vmatprep.mubr.f32.mxu0 0.0
  %491 = vmatmul.mubr.f32.gmra.mrb[0].mxu0 %v179
  %v492 = vpop.f32.mrb[0].mxu0
  %v493 = vadd.f32 0.0, %v492
  %v494 = vpop.f32.mrb[0].mxu0
  %495 = vmatprep.mubr.f32.mxu0 0.0
  %496 = vmatmul.mubr.f32.gmra.mrb[0].mxu0 %v182
  %v497 = vpop.f32.mrb[0].mxu0
  %v498 = vadd.f32 0.0, %v497
  %v499 = vpop.f32.mrb[0].mxu0
  %500 = vmatprep.mubr.f32.mxu0 0.0
  %501 = vmatmul.mubr.f32.gmra.mrb[0].mxu0 %v185
  %v502 = vpop.f32.mrb[0].mxu0
  %v503 = vadd.f32 0.0, %v502
  %v504 = vpop.f32.mrb[0].mxu0
  %505 = vmatprep.mubr.f32.mxu0 0.0
  %506 = vmatmul.mubr.f32.gmra.mrb[0].mxu0 %v188
  %v507 = vpop.f32.mrb[0].mxu0
  %v508 = vadd.f32 0.0, %v507
  %v509 = vpop.f32.mrb[0].mxu0
  %510 = vmatprep.mubr.f32.mxu0 0.0
  %511 = vmatmul.mubr.f32.gmra.mrb[0].mxu0 %v191
  %v512 = vpop.f32.mrb[0].mxu0
  %v513 = vadd.f32 0.0, %v512
  %v514 = vpop.f32.mrb[0].mxu0
  %515 = vmatprep.mubr.f32.mxu0 0.0
  %516 = vmatmul.mubr.f32.gmra.mrb[0].mxu0 %v194
  %v517 = vpop.f32.mrb[0].mxu0
  %v518 = vadd.f32 0.0, %v517
  %v519 = vpop.f32.mrb[0].mxu0
  %520 = vmatprep.mubr.f32.mxu0 0.0
  %521 = vmatmul.mubr.f32.gmra.mrb[0].mxu0 %v197
  %v522 = vpop.f32.mrb[0].mxu0
  %v523 = vadd.f32 0.0, %v522
  %v524 = vpop.f32.mrb[0].mxu0
  %525 = vmatprep.mubr.f32.mxu0 0.0
  %526 = vmatmul.mubr.f32.gmra.mrb[0].mxu0 %v200
  %v527 = vpop.f32.mrb[0].mxu0
  %v528 = vadd.f32 0.0, %v527
  %v529 = vpop.f32.mrb[0].mxu0
  %530 = vmatprep.mubr.f32.mxu0 0.0
  %531 = vmatmul.mubr.f32.gmra.mrb[0].mxu0 %v203
  %v532 = vpop.f32.mrb[0].mxu0
  %v533 = vadd.f32 0.0, %v532
  %v534 = vpop.f32.mrb[0].mxu0
  %535 = vmatprep.mubr.f32.mxu0 0.0
  %536 = vmatmul.mubr.f32.gmra.mrb[0].mxu0 %v206
  %v537 = vpop.f32.mrb[0].mxu0
  %v538 = vadd.f32 0.0, %v537
  %v539 = vpop.f32.mrb[0].mxu0
  %540 = vmatprep.mubr.f32.mxu0 0.0
  %541 = vmatmul.mubr.f32.gmra.mrb[0].mxu0 %v209
  %v542 = vpop.f32.mrb[0].mxu0
  %v543 = vadd.f32 0.0, %v542
  %v544 = vpop.f32.mrb[0].mxu0
  %545 = vmatprep.mubr.f32.mxu0 0.0
  %546 = vmatmul.mubr.f32.gmra.mrb[0].mxu0 %v212
  %v547 = vpop.f32.mrb[0].mxu0
  %v548 = vadd.f32 0.0, %v547
  %v549 = vpop.f32.mrb[0].mxu0
  %550 = vmatprep.mubr.f32.mxu0 0.0
  %551 = vmatmul.mubr.f32.gmra.mrb[0].mxu0 %v215
  %v552 = vpop.f32.mrb[0].mxu0
  %v553 = vadd.f32 0.0, %v552
  %v554 = vpop.f32.mrb[0].mxu0
  %555 = vmatprep.mubr.f32.mxu0 0.0
  %556 = vmatmul.mubr.f32.gmra.mrb[0].mxu0 %v218
  %v557 = vpop.f32.mrb[0].mxu0
  %v558 = vadd.f32 0.0, %v557
  %v559 = vpop.f32.mrb[0].mxu0
  %560 = vmatprep.mubr.f32.mxu0 0.0
  %561 = vmatmul.mubr.f32.gmra.mrb[0].mxu0 %v221
  %v562 = vpop.f32.mrb[0].mxu0
  %v563 = vadd.f32 0.0, %v562
  %v564 = vpop.f32.mrb[0].mxu0
  %565 = vmatprep.mubr.f32.mxu0 0.0
  %566 = vmatmul.mubr.f32.gmra.mrb[0].mxu0 %v224
  %v567 = vpop.f32.mrb[0].mxu0
  %v568 = vadd.f32 0.0, %v567
  %v569 = vpop.f32.mrb[0].mxu0
  %570 = vmatprep.mubr.f32.mxu0 0.0
  %571 = vmatmul.mubr.f32.gmra.mrb[0].mxu0 %v227
  %v572 = vpop.f32.mrb[0].mxu0
  %v573 = vadd.f32 0.0, %v572
  %v574 = vpop.f32.mrb[0].mxu0
  %575 = vmatprep.mubr.f32.mxu0 0.0
  %576 = vmatmul.mubr.f32.gmra.mrb[0].mxu0 %v230
  %v577 = vpop.f32.mrb[0].mxu0
  %v578 = vadd.f32 0.0, %v577
  %v579 = vpop.f32.mrb[0].mxu0
  %580 = vmatprep.mubr.f32.mxu0 0.0
  %581 = vmatmul.mubr.f32.gmra.mrb[0].mxu0 %v233
  %v582 = vpop.f32.mrb[0].mxu0
  %v583 = vadd.f32 0.0, %v582
  %v584 = vpop.f32.mrb[0].mxu0
  %585 = vmatprep.mubr.f32.mxu0 0.0
  %586 = vmatmul.mubr.f32.gmra.mrb[0].mxu0 %v236
  %v587 = vpop.f32.mrb[0].mxu0
  %v588 = vadd.f32 0.0, %v587
  %v589 = vpop.f32.mrb[0].mxu0
  %590 = vmatprep.mubr.f32.mxu0 0.0
  %591 = vmatmul.mubr.f32.gmra.mrb[0].mxu0 %v239
  %v592 = vpop.f32.mrb[0].mxu0
  %v593 = vadd.f32 0.0, %v592
  %v594 = vpop.f32.mrb[0].mxu0
  %595 = vmatprep.mubr.f32.mxu0 0.0
  %596 = vmatmul.mubr.f32.gmra.mrb[0].mxu0 %v242
  %v597 = vpop.f32.mrb[0].mxu0
  %v598 = vadd.f32 0.0, %v597
  %v599 = vpop.f32.mrb[0].mxu0
  %600 = vmatprep.mubr.f32.mxu0 0.0
  %601 = vmatmul.mubr.f32.gmra.mrb[0].mxu0 %v245
  %v602 = vpop.f32.mrb[0].mxu0
  %v603 = vadd.f32 0.0, %v602
  %v604 = vpop.f32.mrb[0].mxu0
  %605 = vmatprep.mubr.f32.mxu0 0.0
  %606 = vmatmul.mubr.f32.gmra.mrb[0].mxu0 %v248
  %v607 = vpop.f32.mrb[0].mxu0
  %v608 = vadd.f32 0.0, %v607
  %v609 = vpop.f32.mrb[0].mxu0
  %610 = vmatprep.mubr.f32.mxu0 0.0
  %611 = vmatmul.mubr.f32.gmra.mrb[0].mxu0 %v251
  %v612 = vpop.f32.mrb[0].mxu0
  %v613 = vadd.f32 0.0, %v612
  %v614 = vpop.f32.mrb[0].mxu0
  %615 = vmatprep.mubr.f32.mxu0 0.0
  %616 = vmatmul.mubr.f32.gmra.mrb[0].mxu0 %v254
  %v617 = vpop.f32.mrb[0].mxu0
  %v618 = vadd.f32 0.0, %v617
  %v619 = vpop.f32.mrb[0].mxu0
  %620 = vmatprep.mubr.f32.mxu0 0.0
  %621 = vmatmul.mubr.f32.gmra.mrb[0].mxu0 %v257
  %v622 = vpop.f32.mrb[0].mxu0
  %v623 = vadd.f32 0.0, %v622
  %v624 = vpop.f32.mrb[0].mxu0
  %625 = vmatprep.mubr.f32.mxu0 0.0
  %626 = vmatmul.mubr.f32.gmra.mrb[0].mxu0 %v260
  %v627 = vpop.f32.mrb[0].mxu0
  %v628 = vadd.f32 0.0, %v627
  %v629 = vpop.f32.mrb[0].mxu0
  %630 = vmatprep.mubr.f32.mxu0 0.0
  %631 = vmatmul.mubr.f32.gmra.mrb[0].mxu0 %v263
  %v632 = vpop.f32.mrb[0].mxu0
  %v633 = vadd.f32 0.0, %v632
  %v634 = vpop.f32.mrb[0].mxu0
  %635 = vmatprep.mubr.f32.mxu0 0.0
  %636 = vmatmul.mubr.f32.gmra.mrb[0].mxu0 %v266
  %v637 = vpop.f32.mrb[0].mxu0
  %v638 = vadd.f32 0.0, %v637
  %v639 = vpop.f32.mrb[0].mxu0
  %640 = vmatprep.mubr.f32.mxu0 0.0
  %641 = vmatmul.mubr.f32.gmra.mrb[0].mxu0 %v269
  %v642 = vpop.f32.mrb[0].mxu0
  %v643 = vadd.f32 0.0, %v642
  %v644 = vpop.f32.mrb[0].mxu0
  %645 = vmatprep.mubr.f32.mxu0 0.0
  %646 = vmatmul.mubr.f32.gmra.mrb[0].mxu0 %v272
  %v647 = vpop.f32.mrb[0].mxu0
  %v648 = vadd.f32 0.0, %v647
  %v649 = vpop.f32.mrb[0].mxu0
  %650 = vmatprep.mubr.f32.mxu0 0.0
  %651 = vmatmul.mubr.f32.gmra.mrb[0].mxu0 %v275
  %v652 = vpop.f32.mrb[0].mxu0
  %v653 = vadd.f32 0.0, %v652
  %v654 = vpop.f32.mrb[0].mxu0
  %655 = vmatprep.mubr.f32.mxu0 0.0
  %656 = vmatmul.mubr.f32.gmra.mrb[0].mxu0 %v278
  %v657 = vpop.f32.mrb[0].mxu0
  %v658 = vadd.f32 0.0, %v657
  %v659 = vpop.f32.mrb[0].mxu0
  %660 = vmatprep.mubr.f32.mxu0 0.0
  %661 = vmatmul.mubr.f32.gmra.mrb[0].mxu0 %v281
  %v662 = vpop.f32.mrb[0].mxu0
  %v663 = vadd.f32 0.0, %v662
  %v664 = vpop.f32.mrb[0].mxu0
  %665 = vmatprep.mubr.f32.mxu0 0.0
  %666 = vmatmul.mubr.f32.gmra.mrb[0].mxu0 %v284
  %v667 = vpop.f32.mrb[0].mxu0
  %v668 = vadd.f32 0.0, %v667
  %v669 = vpop.f32.mrb[0].mxu0
  %670 = vdwg.mxu0
  %v671 = vld [vmem:[%s3] sm:$0x1]
  %v673 = vlaneseq
  %v674 = vshrl.u32 %v673, 7
  %v675 = vsub.s32 0, %v674
  %v676 = vrot.slane %v671, %v675
  %v678 = vmul.f32 %v353, %v676
  %v679 = vmul.f32 %v358, %v676
  %v680 = vmul.f32 %v363, %v676
  %v681 = vmul.f32 %v368, %v676
  %v682 = vmul.f32 %v373, %v676
  %v683 = vmul.f32 %v378, %v676
  %v684 = vmul.f32 %v383, %v676
  %v685 = vmul.f32 %v388, %v676
  %v686 = vmul.f32 %v393, %v676
  %v687 = vmul.f32 %v398, %v676
  %v688 = vmul.f32 %v403, %v676
  %v689 = vmul.f32 %v408, %v676
  %v690 = vmul.f32 %v413, %v676
  %v691 = vmul.f32 %v418, %v676
  %v692 = vmul.f32 %v423, %v676
  %v693 = vmul.f32 %v428, %v676
  %v694 = vmul.f32 %v433, %v676
  %v695 = vmul.f32 %v438, %v676
  %v696 = vmul.f32 %v443, %v676
  %v697 = vmul.f32 %v448, %v676
  %v698 = vmul.f32 %v453, %v676
  %v699 = vmul.f32 %v458, %v676
  %v700 = vmul.f32 %v463, %v676
  %v701 = vmul.f32 %v468, %v676
  %v702 = vmul.f32 %v473, %v676
  %v703 = vmul.f32 %v478, %v676
  %v704 = vmul.f32 %v483, %v676
  %v705 = vmul.f32 %v488, %v676
  %v706 = vmul.f32 %v493, %v676
  %v707 = vmul.f32 %v498, %v676
  %v708 = vmul.f32 %v503, %v676
  %v709 = vmul.f32 %v508, %v676
  %v710 = vmul.f32 %v513, %v676
  %v711 = vmul.f32 %v518, %v676
  %v712 = vmul.f32 %v523, %v676
  %v713 = vmul.f32 %v528, %v676
  %v714 = vmul.f32 %v533, %v676
  %v715 = vmul.f32 %v538, %v676
  %v716 = vmul.f32 %v543, %v676
  %v717 = vmul.f32 %v548, %v676
  %v718 = vmul.f32 %v553, %v676
  %v719 = vmul.f32 %v558, %v676
  %v720 = vmul.f32 %v563, %v676
  %v721 = vmul.f32 %v568, %v676
  %v722 = vmul.f32 %v573, %v676
  %v723 = vmul.f32 %v578, %v676
  %v724 = vmul.f32 %v583, %v676
  %v725 = vmul.f32 %v588, %v676
  %v726 = vmul.f32 %v593, %v676
  %v727 = vmul.f32 %v598, %v676
  %v728 = vmul.f32 %v603, %v676
  %v729 = vmul.f32 %v608, %v676
  %v730 = vmul.f32 %v613, %v676
  %v731 = vmul.f32 %v618, %v676
  %v732 = vmul.f32 %v623, %v676
  %v733 = vmul.f32 %v628, %v676
  %v734 = vmul.f32 %v633, %v676
  %v735 = vmul.f32 %v638, %v676
  %v736 = vmul.f32 %v643, %v676
  %v737 = vmul.f32 %v648, %v676
  %v738 = vmul.f32 %v653, %v676
  %v739 = vmul.f32 %v658, %v676
  %v740 = vmul.f32 %v663, %v676
  %v741 = vmul.f32 %v668, %v676
  %v742 = vld [vmem:[%s5] sm:$0x1]
  %v744 = vlaneseq
  %v745 = vshrl.u32 %v744, 7
  %v746 = vsub.s32 0, %v745
  %v747 = vrot.slane %v742, %v746
  %v749 = vadd.f32 %v678, %v747
  %v750 = vadd.f32 %v679, %v747
  %v751 = vadd.f32 %v680, %v747
  %v752 = vadd.f32 %v681, %v747
  %v753 = vadd.f32 %v682, %v747
  %v754 = vadd.f32 %v683, %v747
  %v755 = vadd.f32 %v684, %v747
  %v756 = vadd.f32 %v685, %v747
  %v757 = vadd.f32 %v686, %v747
  %v758 = vadd.f32 %v687, %v747
  %v759 = vadd.f32 %v688, %v747
  %v760 = vadd.f32 %v689, %v747
  %v761 = vadd.f32 %v690, %v747
  %v762 = vadd.f32 %v691, %v747
  %v763 = vadd.f32 %v692, %v747
  %v764 = vadd.f32 %v693, %v747
  %v765 = vadd.f32 %v694, %v747
  %v766 = vadd.f32 %v695, %v747
  %v767 = vadd.f32 %v696, %v747
  %v768 = vadd.f32 %v697, %v747
  %v769 = vadd.f32 %v698, %v747
  %v770 = vadd.f32 %v699, %v747
  %v771 = vadd.f32 %v700, %v747
  %v772 = vadd.f32 %v701, %v747
  %v773 = vadd.f32 %v702, %v747
  %v774 = vadd.f32 %v703, %v747
  %v775 = vadd.f32 %v704, %v747
  %v776 = vadd.f32 %v705, %v747
  %v777 = vadd.f32 %v706, %v747
  %v778 = vadd.f32 %v707, %v747
  %v779 = vadd.f32 %v708, %v747
  %v780 = vadd.f32 %v709, %v747
  %v781 = vadd.f32 %v710, %v747
  %v782 = vadd.f32 %v711, %v747
  %v783 = vadd.f32 %v712, %v747
  %v784 = vadd.f32 %v713, %v747
  %v785 = vadd.f32 %v714, %v747
  %v786 = vadd.f32 %v715, %v747
  %v787 = vadd.f32 %v716, %v747
  %v788 = vadd.f32 %v717, %v747
  %v789 = vadd.f32 %v718, %v747
  %v790 = vadd.f32 %v719, %v747
  %v791 = vadd.f32 %v720, %v747
  %v792 = vadd.f32 %v721, %v747
  %v793 = vadd.f32 %v722, %v747
  %v794 = vadd.f32 %v723, %v747
  %v795 = vadd.f32 %v724, %v747
  %v796 = vadd.f32 %v725, %v747
  %v797 = vadd.f32 %v726, %v747
  %v798 = vadd.f32 %v727, %v747
  %v799 = vadd.f32 %v728, %v747
  %v800 = vadd.f32 %v729, %v747
  %v801 = vadd.f32 %v730, %v747
  %v802 = vadd.f32 %v731, %v747
  %v803 = vadd.f32 %v732, %v747
  %v804 = vadd.f32 %v733, %v747
  %v805 = vadd.f32 %v734, %v747
  %v806 = vadd.f32 %v735, %v747
  %v807 = vadd.f32 %v736, %v747
  %v808 = vadd.f32 %v737, %v747
  %v809 = vadd.f32 %v738, %v747
  %v810 = vadd.f32 %v739, %v747
  %v811 = vadd.f32 %v740, %v747
  %v812 = vadd.f32 %v741, %v747
  %v813 = vxor.u32 %v749, 2147483648
  %v814 = vxor.u32 %v750, 2147483648
  %v815 = vxor.u32 %v751, 2147483648
  %v816 = vxor.u32 %v752, 2147483648
  %v817 = vxor.u32 %v753, 2147483648
  %v818 = vxor.u32 %v754, 2147483648
  %v819 = vxor.u32 %v755, 2147483648
  %v820 = vxor.u32 %v756, 2147483648
  %v821 = vxor.u32 %v757, 2147483648
  %v822 = vxor.u32 %v758, 2147483648
  %v823 = vxor.u32 %v759, 2147483648
  %v824 = vxor.u32 %v760, 2147483648
  %v825 = vxor.u32 %v761, 2147483648
  %v826 = vxor.u32 %v762, 2147483648
  %v827 = vxor.u32 %v763, 2147483648
  %v828 = vxor.u32 %v764, 2147483648
  %v829 = vxor.u32 %v765, 2147483648
  %v830 = vxor.u32 %v766, 2147483648
  %v831 = vxor.u32 %v767, 2147483648
  %v832 = vxor.u32 %v768, 2147483648
  %v833 = vxor.u32 %v769, 2147483648
  %v834 = vxor.u32 %v770, 2147483648
  %v835 = vxor.u32 %v771, 2147483648
  %v836 = vxor.u32 %v772, 2147483648
  %v837 = vxor.u32 %v773, 2147483648
  %v838 = vxor.u32 %v774, 2147483648
  %v839 = vxor.u32 %v775, 2147483648
  %v840 = vxor.u32 %v776, 2147483648
  %v841 = vxor.u32 %v777, 2147483648
  %v842 = vxor.u32 %v778, 2147483648
  %v843 = vxor.u32 %v779, 2147483648
  %v844 = vxor.u32 %v780, 2147483648
  %v845 = vxor.u32 %v781, 2147483648
  %v846 = vxor.u32 %v782, 2147483648
  %v847 = vxor.u32 %v783, 2147483648
  %v848 = vxor.u32 %v784, 2147483648
  %v849 = vxor.u32 %v785, 2147483648
  %v850 = vxor.u32 %v786, 2147483648
  %v851 = vxor.u32 %v787, 2147483648
  %v852 = vxor.u32 %v788, 2147483648
  %v853 = vxor.u32 %v789, 2147483648
  %v854 = vxor.u32 %v790, 2147483648
  %v855 = vxor.u32 %v791, 2147483648
  %v856 = vxor.u32 %v792, 2147483648
  %v857 = vxor.u32 %v793, 2147483648
  %v858 = vxor.u32 %v794, 2147483648
  %v859 = vxor.u32 %v795, 2147483648
  %v860 = vxor.u32 %v796, 2147483648
  %v861 = vxor.u32 %v797, 2147483648
  %v862 = vxor.u32 %v798, 2147483648
  %v863 = vxor.u32 %v799, 2147483648
  %v864 = vxor.u32 %v800, 2147483648
  %v865 = vxor.u32 %v801, 2147483648
  %v866 = vxor.u32 %v802, 2147483648
  %v867 = vxor.u32 %v803, 2147483648
  %v868 = vxor.u32 %v804, 2147483648
  %v869 = vxor.u32 %v805, 2147483648
  %v870 = vxor.u32 %v806, 2147483648
  %v871 = vxor.u32 %v807, 2147483648
  %v872 = vxor.u32 %v808, 2147483648
  %v873 = vxor.u32 %v809, 2147483648
  %v874 = vxor.u32 %v810, 2147483648
  %v875 = vxor.u32 %v811, 2147483648
  %v876 = vxor.u32 %v812, 2147483648
  %v877 = vmul.f32 %v813, 1.442695
  %v878 = vpow.pop %v877
  %v879 = vmul.f32 %v814, 1.442695
  %v880 = vpow.pop %v879
  %v881 = vmul.f32 %v815, 1.442695
  %v882 = vpow.pop %v881
  %v883 = vmul.f32 %v816, 1.442695
  %v884 = vpow.pop %v883
  %v885 = vmul.f32 %v817, 1.442695
  %v886 = vpow.pop %v885
  %v887 = vmul.f32 %v818, 1.442695
  %v888 = vpow.pop %v887
  %v889 = vmul.f32 %v819, 1.442695
  %v890 = vpow.pop %v889
  %v891 = vmul.f32 %v820, 1.442695
  %v892 = vpow.pop %v891
  %v893 = vmul.f32 %v821, 1.442695
  %v894 = vpow.pop %v893
  %v895 = vmul.f32 %v822, 1.442695
  %v896 = vpow.pop %v895
  %v897 = vmul.f32 %v823, 1.442695
  %v898 = vpow.pop %v897
  %v899 = vmul.f32 %v824, 1.442695
  %v900 = vpow.pop %v899
  %v901 = vmul.f32 %v825, 1.442695
  %v902 = vpow.pop %v901
  %v903 = vmul.f32 %v826, 1.442695
  %v904 = vpow.pop %v903
  %v905 = vmul.f32 %v827, 1.442695
  %v906 = vpow.pop %v905
  %v907 = vmul.f32 %v828, 1.442695
  %v908 = vpow.pop %v907
  %v909 = vmul.f32 %v829, 1.442695
  %v910 = vpow.pop %v909
  %v911 = vmul.f32 %v830, 1.442695
  %v912 = vpow.pop %v911
  %v913 = vmul.f32 %v831, 1.442695
  %v914 = vpow.pop %v913
  %v915 = vmul.f32 %v832, 1.442695
  %v916 = vpow.pop %v915
  %v917 = vmul.f32 %v833, 1.442695
  %v918 = vpow.pop %v917
  %v919 = vmul.f32 %v834, 1.442695
  %v920 = vpow.pop %v919
  %v921 = vmul.f32 %v835, 1.442695
  %v922 = vpow.pop %v921
  %v923 = vmul.f32 %v836, 1.442695
  %v924 = vpow.pop %v923
  %v925 = vmul.f32 %v837, 1.442695
  %v926 = vpow.pop %v925
  %v927 = vmul.f32 %v838, 1.442695
  %v928 = vpow.pop %v927
  %v929 = vmul.f32 %v839, 1.442695
  %v930 = vpow.pop %v929
  %v931 = vmul.f32 %v840, 1.442695
  %v932 = vpow.pop %v931
  %v933 = vmul.f32 %v841, 1.442695
  %v934 = vpow.pop %v933
  %v935 = vmul.f32 %v842, 1.442695
  %v936 = vpow.pop %v935
  %v937 = vmul.f32 %v843, 1.442695
  %v938 = vpow.pop %v937
  %v939 = vmul.f32 %v844, 1.442695
  %v940 = vpow.pop %v939
  %v941 = vmul.f32 %v845, 1.442695
  %v942 = vpow.pop %v941
  %v943 = vmul.f32 %v846, 1.442695
  %v944 = vpow.pop %v943
  %v945 = vmul.f32 %v847, 1.442695
  %v946 = vpow.pop %v945
  %v947 = vmul.f32 %v848, 1.442695
  %v948 = vpow.pop %v947
  %v949 = vmul.f32 %v849, 1.442695
  %v950 = vpow.pop %v949
  %v951 = vmul.f32 %v850, 1.442695
  %v952 = vpow.pop %v951
  %v953 = vmul.f32 %v851, 1.442695
  %v954 = vpow.pop %v953
  %v955 = vmul.f32 %v852, 1.442695
  %v956 = vpow.pop %v955
  %v957 = vmul.f32 %v853, 1.442695
  %v958 = vpow.pop %v957
  %v959 = vmul.f32 %v854, 1.442695
  %v960 = vpow.pop %v959
  %v961 = vmul.f32 %v855, 1.442695
  %v962 = vpow.pop %v961
  %v963 = vmul.f32 %v856, 1.442695
  %v964 = vpow.pop %v963
  %v965 = vmul.f32 %v857, 1.442695
  %v966 = vpow.pop %v965
  %v967 = vmul.f32 %v858, 1.442695
  %v968 = vpow.pop %v967
  %v969 = vmul.f32 %v859, 1.442695
  %v970 = vpow.pop %v969
  %v971 = vmul.f32 %v860, 1.442695
  %v972 = vpow.pop %v971
  %v973 = vmul.f32 %v861, 1.442695
  %v974 = vpow.pop %v973
  %v975 = vmul.f32 %v862, 1.442695
  %v976 = vpow.pop %v975
  %v977 = vmul.f32 %v863, 1.442695
  %v978 = vpow.pop %v977
  %v979 = vmul.f32 %v864, 1.442695
  %v980 = vpow.pop %v979
  %v981 = vmul.f32 %v865, 1.442695
  %v982 = vpow.pop %v981
  %v983 = vmul.f32 %v866, 1.442695
  %v984 = vpow.pop %v983
  %v985 = vmul.f32 %v867, 1.442695
  %v986 = vpow.pop %v985
  %v987 = vmul.f32 %v868, 1.442695
  %v988 = vpow.pop %v987
  %v989 = vmul.f32 %v869, 1.442695
  %v990 = vpow.pop %v989
  %v991 = vmul.f32 %v870, 1.442695
  %v992 = vpow.pop %v991
  %v993 = vmul.f32 %v871, 1.442695
  %v994 = vpow.pop %v993
  %v995 = vmul.f32 %v872, 1.442695
  %v996 = vpow.pop %v995
  %v997 = vmul.f32 %v873, 1.442695
  %v998 = vpow.pop %v997
  %v999 = vmul.f32 %v874, 1.442695
  %v1000 = vpow.pop %v999
  %v1001 = vmul.f32 %v875, 1.442695
  %v1002 = vpow.pop %v1001
  %v1003 = vmul.f32 %v876, 1.442695
  %v1004 = vpow.pop %v1003
  %v1005 = vadd.f32 %v878, 1.0
  %v1006 = vadd.f32 %v880, 1.0
  %v1007 = vadd.f32 %v882, 1.0
  %v1008 = vadd.f32 %v884, 1.0
  %v1009 = vadd.f32 %v886, 1.0
  %v1010 = vadd.f32 %v888, 1.0
  %v1011 = vadd.f32 %v890, 1.0
  %v1012 = vadd.f32 %v892, 1.0
  %v1013 = vadd.f32 %v894, 1.0
  %v1014 = vadd.f32 %v896, 1.0
  %v1015 = vadd.f32 %v898, 1.0
  %v1016 = vadd.f32 %v900, 1.0
  %v1017 = vadd.f32 %v902, 1.0
  %v1018 = vadd.f32 %v904, 1.0
  %v1019 = vadd.f32 %v906, 1.0
  %v1020 = vadd.f32 %v908, 1.0
  %v1021 = vadd.f32 %v910, 1.0
  %v1022 = vadd.f32 %v912, 1.0
  %v1023 = vadd.f32 %v914, 1.0
  %v1024 = vadd.f32 %v916, 1.0
  %v1025 = vadd.f32 %v918, 1.0
  %v1026 = vadd.f32 %v920, 1.0
  %v1027 = vadd.f32 %v922, 1.0
  %v1028 = vadd.f32 %v924, 1.0
  %v1029 = vadd.f32 %v926, 1.0
  %v1030 = vadd.f32 %v928, 1.0
  %v1031 = vadd.f32 %v930, 1.0
  %v1032 = vadd.f32 %v932, 1.0
  %v1033 = vadd.f32 %v934, 1.0
  %v1034 = vadd.f32 %v936, 1.0
  %v1035 = vadd.f32 %v938, 1.0
  %v1036 = vadd.f32 %v940, 1.0
  %v1037 = vadd.f32 %v942, 1.0
  %v1038 = vadd.f32 %v944, 1.0
  %v1039 = vadd.f32 %v946, 1.0
  %v1040 = vadd.f32 %v948, 1.0
  %v1041 = vadd.f32 %v950, 1.0
  %v1042 = vadd.f32 %v952, 1.0
  %v1043 = vadd.f32 %v954, 1.0
  %v1044 = vadd.f32 %v956, 1.0
  %v1045 = vadd.f32 %v958, 1.0
  %v1046 = vadd.f32 %v960, 1.0
  %v1047 = vadd.f32 %v962, 1.0
  %v1048 = vadd.f32 %v964, 1.0
  %v1049 = vadd.f32 %v966, 1.0
  %v1050 = vadd.f32 %v968, 1.0
  %v1051 = vadd.f32 %v970, 1.0
  %v1052 = vadd.f32 %v972, 1.0
  %v1053 = vadd.f32 %v974, 1.0
  %v1054 = vadd.f32 %v976, 1.0
  %v1055 = vadd.f32 %v978, 1.0
  %v1056 = vadd.f32 %v980, 1.0
  %v1057 = vadd.f32 %v982, 1.0
  %v1058 = vadd.f32 %v984, 1.0
  %v1059 = vadd.f32 %v986, 1.0
  %v1060 = vadd.f32 %v988, 1.0
  %v1061 = vadd.f32 %v990, 1.0
  %v1062 = vadd.f32 %v992, 1.0
  %v1063 = vadd.f32 %v994, 1.0
  %v1064 = vadd.f32 %v996, 1.0
  %v1065 = vadd.f32 %v998, 1.0
  %v1066 = vadd.f32 %v1000, 1.0
  %v1067 = vadd.f32 %v1002, 1.0
  %v1068 = vadd.f32 %v1004, 1.0
  %v1069 = vrcp.pop %v1005
  %v1070 = vmul.f32 1.0, %v1069
  %v1071 = vrcp.pop %v1006
  %v1072 = vmul.f32 1.0, %v1071
  %v1073 = vrcp.pop %v1007
  %v1074 = vmul.f32 1.0, %v1073
  %v1075 = vrcp.pop %v1008
  %v1076 = vmul.f32 1.0, %v1075
  %v1077 = vrcp.pop %v1009
  %v1078 = vmul.f32 1.0, %v1077
  %v1079 = vrcp.pop %v1010
  %v1080 = vmul.f32 1.0, %v1079
  %v1081 = vrcp.pop %v1011
  %v1082 = vmul.f32 1.0, %v1081
  %v1083 = vrcp.pop %v1012
  %v1084 = vmul.f32 1.0, %v1083
  %v1085 = vrcp.pop %v1013
  %v1086 = vmul.f32 1.0, %v1085
  %v1087 = vrcp.pop %v1014
  %v1088 = vmul.f32 1.0, %v1087
  %v1089 = vrcp.pop %v1015
  %v1090 = vmul.f32 1.0, %v1089
  %v1091 = vrcp.pop %v1016
  %v1092 = vmul.f32 1.0, %v1091
  %v1093 = vrcp.pop %v1017
  %v1094 = vmul.f32 1.0, %v1093
  %v1095 = vrcp.pop %v1018
  %v1096 = vmul.f32 1.0, %v1095
  %v1097 = vrcp.pop %v1019
  %v1098 = vmul.f32 1.0, %v1097
  %v1099 = vrcp.pop %v1020
  %v1100 = vmul.f32 1.0, %v1099
  %v1101 = vrcp.pop %v1021
  %v1102 = vmul.f32 1.0, %v1101
  %v1103 = vrcp.pop %v1022
  %v1104 = vmul.f32 1.0, %v1103
  %v1105 = vrcp.pop %v1023
  %v1106 = vmul.f32 1.0, %v1105
  %v1107 = vrcp.pop %v1024
  %v1108 = vmul.f32 1.0, %v1107
  %v1109 = vrcp.pop %v1025
  %v1110 = vmul.f32 1.0, %v1109
  %v1111 = vrcp.pop %v1026
  %v1112 = vmul.f32 1.0, %v1111
  %v1113 = vrcp.pop %v1027
  %v1114 = vmul.f32 1.0, %v1113
  %v1115 = vrcp.pop %v1028
  %v1116 = vmul.f32 1.0, %v1115
  %v1117 = vrcp.pop %v1029
  %v1118 = vmul.f32 1.0, %v1117
  %v1119 = vrcp.pop %v1030
  %v1120 = vmul.f32 1.0, %v1119
  %v1121 = vrcp.pop %v1031
  %v1122 = vmul.f32 1.0, %v1121
  %v1123 = vrcp.pop %v1032
  %v1124 = vmul.f32 1.0, %v1123
  %v1125 = vrcp.pop %v1033
  %v1126 = vmul.f32 1.0, %v1125
  %v1127 = vrcp.pop %v1034
  %v1128 = vmul.f32 1.0, %v1127
  %v1129 = vrcp.pop %v1035
  %v1130 = vmul.f32 1.0, %v1129
  %v1131 = vrcp.pop %v1036
  %v1132 = vmul.f32 1.0, %v1131
  %v1133 = vrcp.pop %v1037
  %v1134 = vmul.f32 1.0, %v1133
  %v1135 = vrcp.pop %v1038
  %v1136 = vmul.f32 1.0, %v1135
  %v1137 = vrcp.pop %v1039
  %v1138 = vmul.f32 1.0, %v1137
  %v1139 = vrcp.pop %v1040
  %v1140 = vmul.f32 1.0, %v1139
  %v1141 = vrcp.pop %v1041
  %v1142 = vmul.f32 1.0, %v1141
  %v1143 = vrcp.pop %v1042
  %v1144 = vmul.f32 1.0, %v1143
  %v1145 = vrcp.pop %v1043
  %v1146 = vmul.f32 1.0, %v1145
  %v1147 = vrcp.pop %v1044
  %v1148 = vmul.f32 1.0, %v1147
  %v1149 = vrcp.pop %v1045
  %v1150 = vmul.f32 1.0, %v1149
  %v1151 = vrcp.pop %v1046
  %v1152 = vmul.f32 1.0, %v1151
  %v1153 = vrcp.pop %v1047
  %v1154 = vmul.f32 1.0, %v1153
  %v1155 = vrcp.pop %v1048
  %v1156 = vmul.f32 1.0, %v1155
  %v1157 = vrcp.pop %v1049
  %v1158 = vmul.f32 1.0, %v1157
  %v1159 = vrcp.pop %v1050
  %v1160 = vmul.f32 1.0, %v1159
  %v1161 = vrcp.pop %v1051
  %v1162 = vmul.f32 1.0, %v1161
  %v1163 = vrcp.pop %v1052
  %v1164 = vmul.f32 1.0, %v1163
  %v1165 = vrcp.pop %v1053
  %v1166 = vmul.f32 1.0, %v1165
  %v1167 = vrcp.pop %v1054
  %v1168 = vmul.f32 1.0, %v1167
  %v1169 = vrcp.pop %v1055
  %v1170 = vmul.f32 1.0, %v1169
  %v1171 = vrcp.pop %v1056
  %v1172 = vmul.f32 1.0, %v1171
  %v1173 = vrcp.pop %v1057
  %v1174 = vmul.f32 1.0, %v1173
  %v1175 = vrcp.pop %v1058
  %v1176 = vmul.f32 1.0, %v1175
  %v1177 = vrcp.pop %v1059
  %v1178 = vmul.f32 1.0, %v1177
  %v1179 = vrcp.pop %v1060
  %v1180 = vmul.f32 1.0, %v1179
  %v1181 = vrcp.pop %v1061
  %v1182 = vmul.f32 1.0, %v1181
  %v1183 = vrcp.pop %v1062
  %v1184 = vmul.f32 1.0, %v1183
  %v1185 = vrcp.pop %v1063
  %v1186 = vmul.f32 1.0, %v1185
  %v1187 = vrcp.pop %v1064
  %v1188 = vmul.f32 1.0, %v1187
  %v1189 = vrcp.pop %v1065
  %v1190 = vmul.f32 1.0, %v1189
  %v1191 = vrcp.pop %v1066
  %v1192 = vmul.f32 1.0, %v1191
  %v1193 = vrcp.pop %v1067
  %v1194 = vmul.f32 1.0, %v1193
  %v1195 = vrcp.pop %v1068
  %v1196 = vmul.f32 1.0, %v1195
  %v1197 = vmul.f32 %v749, %v1070
  %v1198 = vmul.f32 %v750, %v1072
  %v1199 = vmul.f32 %v751, %v1074
  %v1200 = vmul.f32 %v752, %v1076
  %v1201 = vmul.f32 %v753, %v1078
  %v1202 = vmul.f32 %v754, %v1080
  %v1203 = vmul.f32 %v755, %v1082
  %v1204 = vmul.f32 %v756, %v1084
  %v1205 = vmul.f32 %v757, %v1086
  %v1206 = vmul.f32 %v758, %v1088
  %v1207 = vmul.f32 %v759, %v1090
  %v1208 = vmul.f32 %v760, %v1092
  %v1209 = vmul.f32 %v761, %v1094
  %v1210 = vmul.f32 %v762, %v1096
  %v1211 = vmul.f32 %v763, %v1098
  %v1212 = vmul.f32 %v764, %v1100
  %v1213 = vmul.f32 %v765, %v1102
  %v1214 = vmul.f32 %v766, %v1104
  %v1215 = vmul.f32 %v767, %v1106
  %v1216 = vmul.f32 %v768, %v1108
  %v1217 = vmul.f32 %v769, %v1110
  %v1218 = vmul.f32 %v770, %v1112
  %v1219 = vmul.f32 %v771, %v1114
  %v1220 = vmul.f32 %v772, %v1116
  %v1221 = vmul.f32 %v773, %v1118
  %v1222 = vmul.f32 %v774, %v1120
  %v1223 = vmul.f32 %v775, %v1122
  %v1224 = vmul.f32 %v776, %v1124
  %v1225 = vmul.f32 %v777, %v1126
  %v1226 = vmul.f32 %v778, %v1128
  %v1227 = vmul.f32 %v779, %v1130
  %v1228 = vmul.f32 %v780, %v1132
  %v1229 = vmul.f32 %v781, %v1134
  %v1230 = vmul.f32 %v782, %v1136
  %v1231 = vmul.f32 %v783, %v1138
  %v1232 = vmul.f32 %v784, %v1140
  %v1233 = vmul.f32 %v785, %v1142
  %v1234 = vmul.f32 %v786, %v1144
  %v1235 = vmul.f32 %v787, %v1146
  %v1236 = vmul.f32 %v788, %v1148
  %v1237 = vmul.f32 %v789, %v1150
  %v1238 = vmul.f32 %v790, %v1152
  %v1239 = vmul.f32 %v791, %v1154
  %v1240 = vmul.f32 %v792, %v1156
  %v1241 = vmul.f32 %v793, %v1158
  %v1242 = vmul.f32 %v794, %v1160
  %v1243 = vmul.f32 %v795, %v1162
  %v1244 = vmul.f32 %v796, %v1164
  %v1245 = vmul.f32 %v797, %v1166
  %v1246 = vmul.f32 %v798, %v1168
  %v1247 = vmul.f32 %v799, %v1170
  %v1248 = vmul.f32 %v800, %v1172
  %v1249 = vmul.f32 %v801, %v1174
  %v1250 = vmul.f32 %v802, %v1176
  %v1251 = vmul.f32 %v803, %v1178
  %v1252 = vmul.f32 %v804, %v1180
  %v1253 = vmul.f32 %v805, %v1182
  %v1254 = vmul.f32 %v806, %v1184
  %v1255 = vmul.f32 %v807, %v1186
  %v1256 = vmul.f32 %v808, %v1188
  %v1257 = vmul.f32 %v809, %v1190
  %v1258 = vmul.f32 %v810, %v1192
  %v1259 = vmul.f32 %v811, %v1194
  %v1260 = vmul.f32 %v812, %v1196
  %vm1261 = vcmask 31744
  %1262 = vst.msk [vmem:[%s7] sm:$0xff] %vm1261, %v1197
  %1263 = vst.msk [vmem:[%s7 + $0x8] sm:$0xff] %vm1261, %v1198
  %1264 = vst.msk [vmem:[%s7 + $0x10] sm:$0xff] %vm1261, %v1199
  %1265 = vst.msk [vmem:[%s7 + $0x18] sm:$0xff] %vm1261, %v1200
  %1266 = vst.msk [vmem:[%s7 + $0x20] sm:$0xff] %vm1261, %v1201
  %1267 = vst.msk [vmem:[%s7 + $0x28] sm:$0xff] %vm1261, %v1202
  %1268 = vst.msk [vmem:[%s7 + $0x30] sm:$0xff] %vm1261, %v1203
  %1269 = vst.msk [vmem:[%s7 + $0x38] sm:$0xff] %vm1261, %v1204
  %1270 = vst.msk [vmem:[%s7 + $0x40] sm:$0xff] %vm1261, %v1205
  %1271 = vst.msk [vmem:[%s7 + $0x48] sm:$0xff] %vm1261, %v1206
  %1272 = vst.msk [vmem:[%s7 + $0x50] sm:$0xff] %vm1261, %v1207
  %1273 = vst.msk [vmem:[%s7 + $0x58] sm:$0xff] %vm1261, %v1208
  %1274 = vst.msk [vmem:[%s7 + $0x60] sm:$0xff] %vm1261, %v1209
  %1275 = vst.msk [vmem:[%s7 + $0x68] sm:$0xff] %vm1261, %v1210
  %1276 = vst.msk [vmem:[%s7 + $0x70] sm:$0xff] %vm1261, %v1211
  %1277 = vst.msk [vmem:[%s7 + $0x78] sm:$0xff] %vm1261, %v1212
  %1278 = vst.msk [vmem:[%s7 + $0x80] sm:$0xff] %vm1261, %v1213
  %1279 = vst.msk [vmem:[%s7 + $0x88] sm:$0xff] %vm1261, %v1214
  %1280 = vst.msk [vmem:[%s7 + $0x90] sm:$0xff] %vm1261, %v1215
  %1281 = vst.msk [vmem:[%s7 + $0x98] sm:$0xff] %vm1261, %v1216
  %1282 = vst.msk [vmem:[%s7 + $0xa0] sm:$0xff] %vm1261, %v1217
  %1283 = vst.msk [vmem:[%s7 + $0xa8] sm:$0xff] %vm1261, %v1218
  %1284 = vst.msk [vmem:[%s7 + $0xb0] sm:$0xff] %vm1261, %v1219
  %1285 = vst.msk [vmem:[%s7 + $0xb8] sm:$0xff] %vm1261, %v1220
  %1286 = vst.msk [vmem:[%s7 + $0xc0] sm:$0xff] %vm1261, %v1221
  %1287 = vst.msk [vmem:[%s7 + $0xc8] sm:$0xff] %vm1261, %v1222
  %1288 = vst.msk [vmem:[%s7 + $0xd0] sm:$0xff] %vm1261, %v1223
  %1289 = vst.msk [vmem:[%s7 + $0xd8] sm:$0xff] %vm1261, %v1224
  %1290 = vst.msk [vmem:[%s7 + $0xe0] sm:$0xff] %vm1261, %v1225
  %1291 = vst.msk [vmem:[%s7 + $0xe8] sm:$0xff] %vm1261, %v1226
  %1292 = vst.msk [vmem:[%s7 + $0xf0] sm:$0xff] %vm1261, %v1227
  %1293 = vst.msk [vmem:[%s7 + $0xf8] sm:$0xff] %vm1261, %v1228
  %1294 = vst.msk [vmem:[%s7 + $0x100] sm:$0xff] %vm1261, %v1229
  %1295 = vst.msk [vmem:[%s7 + $0x108] sm:$0xff] %vm1261, %v1230
  %1296 = vst.msk [vmem:[%s7 + $0x110] sm:$0xff] %vm1261, %v1231
  %1297 = vst.msk [vmem:[%s7 + $0x118] sm:$0xff] %vm1261, %v1232
  %1298 = vst.msk [vmem:[%s7 + $0x120] sm:$0xff] %vm1261, %v1233
  %1299 = vst.msk [vmem:[%s7 + $0x128] sm:$0xff] %vm1261, %v1234
  %1300 = vst.msk [vmem:[%s7 + $0x130] sm:$0xff] %vm1261, %v1235
  %1301 = vst.msk [vmem:[%s7 + $0x138] sm:$0xff] %vm1261, %v1236
  %1302 = vst.msk [vmem:[%s7 + $0x140] sm:$0xff] %vm1261, %v1237
  %1303 = vst.msk [vmem:[%s7 + $0x148] sm:$0xff] %vm1261, %v1238
  %1304 = vst.msk [vmem:[%s7 + $0x150] sm:$0xff] %vm1261, %v1239
  %1305 = vst.msk [vmem:[%s7 + $0x158] sm:$0xff] %vm1261, %v1240
  %1306 = vst.msk [vmem:[%s7 + $0x160] sm:$0xff] %vm1261, %v1241
  %1307 = vst.msk [vmem:[%s7 + $0x168] sm:$0xff] %vm1261, %v1242
  %1308 = vst.msk [vmem:[%s7 + $0x170] sm:$0xff] %vm1261, %v1243
  %1309 = vst.msk [vmem:[%s7 + $0x178] sm:$0xff] %vm1261, %v1244
  %1310 = vst.msk [vmem:[%s7 + $0x180] sm:$0xff] %vm1261, %v1245
  %1311 = vst.msk [vmem:[%s7 + $0x188] sm:$0xff] %vm1261, %v1246
  %1312 = vst.msk [vmem:[%s7 + $0x190] sm:$0xff] %vm1261, %v1247
  %1313 = vst.msk [vmem:[%s7 + $0x198] sm:$0xff] %vm1261, %v1248
  %1314 = vst.msk [vmem:[%s7 + $0x1a0] sm:$0xff] %vm1261, %v1249
  %1315 = vst.msk [vmem:[%s7 + $0x1a8] sm:$0xff] %vm1261, %v1250
  %1316 = vst.msk [vmem:[%s7 + $0x1b0] sm:$0xff] %vm1261, %v1251
  %1317 = vst.msk [vmem:[%s7 + $0x1b8] sm:$0xff] %vm1261, %v1252
  %1318 = vst.msk [vmem:[%s7 + $0x1c0] sm:$0xff] %vm1261, %v1253
  %1319 = vst.msk [vmem:[%s7 + $0x1c8] sm:$0xff] %vm1261, %v1254
  %1320 = vst.msk [vmem:[%s7 + $0x1d0] sm:$0xff] %vm1261, %v1255
  %1321 = vst.msk [vmem:[%s7 + $0x1d8] sm:$0xff] %vm1261, %v1256
  %1322 = vst.msk [vmem:[%s7 + $0x1e0] sm:$0xff] %vm1261, %v1257
  %1323 = vst.msk [vmem:[%s7 + $0x1e8] sm:$0xff] %vm1261, %v1258
  %1324 = vst.msk [vmem:[%s7 + $0x1f0] sm:$0xff] %vm1261, %v1259
  %1325 = vst.msk [vmem:[%s7 + $0x1f8] sm:$0xff] %vm1261, %v1260
  %v1326 = vld [vmem:[%s0] sm:$0xff]
  %v1327 = vld [vmem:[%s0 + $0x8] sm:$0xff]
  %v1328 = vld [vmem:[%s0 + $0x10] sm:$0xff]
  %v1329 = vld [vmem:[%s0 + $0x18] sm:$0xff]
  %v1330 = vld [vmem:[%s0 + $0x20] sm:$0xff]
  %v1331 = vld [vmem:[%s0 + $0x28] sm:$0xff]
  %v1332 = vld [vmem:[%s0 + $0x30] sm:$0xff]
  %v1333 = vld [vmem:[%s0 + $0x38] sm:$0xff]
  %v1334 = vld [vmem:[%s0 + $0x40] sm:$0xff]
  %v1335 = vld [vmem:[%s0 + $0x48] sm:$0xff]
  %v1336 = vld [vmem:[%s0 + $0x50] sm:$0xff]
  %v1337 = vld [vmem:[%s0 + $0x58] sm:$0xff]
  %v1338 = vld [vmem:[%s0 + $0x60] sm:$0xff]
  %v1339 = vld [vmem:[%s0 + $0x68] sm:$0xff]
  %v1340 = vld [vmem:[%s0 + $0x70] sm:$0xff]
  %v1341 = vld [vmem:[%s0 + $0x78] sm:$0xff]
  %v1342 = vld [vmem:[%s0 + $0x80] sm:$0xff]
  %v1343 = vld [vmem:[%s0 + $0x88] sm:$0xff]
  %v1344 = vld [vmem:[%s0 + $0x90] sm:$0xff]
  %v1345 = vld [vmem:[%s0 + $0x98] sm:$0xff]
  %v1346 = vld [vmem:[%s0 + $0xa0] sm:$0xff]
  %v1347 = vld [vmem:[%s0 + $0xa8] sm:$0xff]
  %v1348 = vld [vmem:[%s0 + $0xb0] sm:$0xff]
  %v1349 = vld [vmem:[%s0 + $0xb8] sm:$0xff]
  %v1350 = vld [vmem:[%s0 + $0xc0] sm:$0xff]
  %v1351 = vld [vmem:[%s0 + $0xc8] sm:$0xff]
  %v1352 = vld [vmem:[%s0 + $0xd0] sm:$0xff]
  %v1353 = vld [vmem:[%s0 + $0xd8] sm:$0xff]
  %v1354 = vld [vmem:[%s0 + $0xe0] sm:$0xff]
  %v1355 = vld [vmem:[%s0 + $0xe8] sm:$0xff]
  %v1356 = vld [vmem:[%s0 + $0xf0] sm:$0xff]
  %v1357 = vld [vmem:[%s0 + $0xf8] sm:$0xff]
  %v1358 = vld [vmem:[%s0 + $0x100] sm:$0xff]
  %v1359 = vld [vmem:[%s0 + $0x108] sm:$0xff]
  %v1360 = vld [vmem:[%s0 + $0x110] sm:$0xff]
  %v1361 = vld [vmem:[%s0 + $0x118] sm:$0xff]
  %v1362 = vld [vmem:[%s0 + $0x120] sm:$0xff]
  %v1363 = vld [vmem:[%s0 + $0x128] sm:$0xff]
  %v1364 = vld [vmem:[%s0 + $0x130] sm:$0xff]
  %v1365 = vld [vmem:[%s0 + $0x138] sm:$0xff]
  %v1366 = vld [vmem:[%s0 + $0x140] sm:$0xff]
  %v1367 = vld [vmem:[%s0 + $0x148] sm:$0xff]
  %v1368 = vld [vmem:[%s0 + $0x150] sm:$0xff]
  %v1369 = vld [vmem:[%s0 + $0x158] sm:$0xff]
  %v1370 = vld [vmem:[%s0 + $0x160] sm:$0xff]
  %v1371 = vld [vmem:[%s0 + $0x168] sm:$0xff]
  %v1372 = vld [vmem:[%s0 + $0x170] sm:$0xff]
  %v1373 = vld [vmem:[%s0 + $0x178] sm:$0xff]
  %v1374 = vld [vmem:[%s0 + $0x180] sm:$0xff]
  %v1375 = vld [vmem:[%s0 + $0x188] sm:$0xff]
  %v1376 = vld [vmem:[%s0 + $0x190] sm:$0xff]
  %v1377 = vld [vmem:[%s0 + $0x198] sm:$0xff]
  %v1378 = vld [vmem:[%s0 + $0x1a0] sm:$0xff]
  %v1379 = vld [vmem:[%s0 + $0x1a8] sm:$0xff]
  %v1380 = vld [vmem:[%s0 + $0x1b0] sm:$0xff]
  %v1381 = vld [vmem:[%s0 + $0x1b8] sm:$0xff]
  %v1382 = vld [vmem:[%s0 + $0x1c0] sm:$0xff]
  %v1383 = vld [vmem:[%s0 + $0x1c8] sm:$0xff]
  %v1384 = vld [vmem:[%s0 + $0x1d0] sm:$0xff]
  %v1385 = vld [vmem:[%s0 + $0x1d8] sm:$0xff]
  %v1386 = vld [vmem:[%s0 + $0x1e0] sm:$0xff]
  %v1387 = vld [vmem:[%s0 + $0x1e8] sm:$0xff]
  %v1388 = vld [vmem:[%s0 + $0x1f0] sm:$0xff]
  %v1389 = vld [vmem:[%s0 + $0x1f8] sm:$0xff]
  %v1390 = vld [vmem:[%s2] sm:$0xff]
  %v1392 = vsel %vm93, %v1326, 0
  %v1395 = vsel %vm93, %v1327, 0
  %v1398 = vsel %vm93, %v1328, 0
  %v1401 = vsel %vm93, %v1329, 0
  %v1404 = vsel %vm93, %v1330, 0
  %v1407 = vsel %vm93, %v1331, 0
  %v1410 = vsel %vm93, %v1332, 0
  %v1413 = vsel %vm93, %v1333, 0
  %v1416 = vsel %vm93, %v1334, 0
  %v1419 = vsel %vm93, %v1335, 0
  %v1422 = vsel %vm93, %v1336, 0
  %v1425 = vsel %vm93, %v1337, 0
  %v1428 = vsel %vm93, %v1338, 0
  %v1431 = vsel %vm93, %v1339, 0
  %v1434 = vsel %vm93, %v1340, 0
  %v1437 = vsel %vm93, %v1341, 0
  %v1440 = vsel %vm93, %v1342, 0
  %v1443 = vsel %vm93, %v1343, 0
  %v1446 = vsel %vm93, %v1344, 0
  %v1449 = vsel %vm93, %v1345, 0
  %v1452 = vsel %vm93, %v1346, 0
  %v1455 = vsel %vm93, %v1347, 0
  %v1458 = vsel %vm93, %v1348, 0
  %v1461 = vsel %vm93, %v1349, 0
  %v1464 = vsel %vm93, %v1350, 0
  %v1467 = vsel %vm93, %v1351, 0
  %v1470 = vsel %vm93, %v1352, 0
  %v1473 = vsel %vm93, %v1353, 0
  %v1476 = vsel %vm93, %v1354, 0
  %v1479 = vsel %vm93, %v1355, 0
  %v1482 = vsel %vm93, %v1356, 0
  %v1485 = vsel %vm93, %v1357, 0
  %v1488 = vsel %vm93, %v1358, 0
  %v1491 = vsel %vm93, %v1359, 0
  %v1494 = vsel %vm93, %v1360, 0
  %v1497 = vsel %vm93, %v1361, 0
  %v1500 = vsel %vm93, %v1362, 0
  %v1503 = vsel %vm93, %v1363, 0
  %v1506 = vsel %vm93, %v1364, 0
  %v1509 = vsel %vm93, %v1365, 0
  %v1512 = vsel %vm93, %v1366, 0
  %v1515 = vsel %vm93, %v1367, 0
  %v1518 = vsel %vm93, %v1368, 0
  %v1521 = vsel %vm93, %v1369, 0
  %v1524 = vsel %vm93, %v1370, 0
  %v1527 = vsel %vm93, %v1371, 0
  %v1530 = vsel %vm93, %v1372, 0
  %v1533 = vsel %vm93, %v1373, 0
  %v1536 = vsel %vm93, %v1374, 0
  %v1539 = vsel %vm93, %v1375, 0
  %v1542 = vsel %vm93, %v1376, 0
  %v1545 = vsel %vm93, %v1377, 0
  %v1548 = vsel %vm93, %v1378, 0
  %v1551 = vsel %vm93, %v1379, 0
  %v1554 = vsel %vm93, %v1380, 0
  %v1557 = vsel %vm93, %v1381, 0
  %v1560 = vsel %vm93, %v1382, 0
  %v1563 = vsel %vm93, %v1383, 0
  %v1566 = vsel %vm93, %v1384, 0
  %v1569 = vsel %vm93, %v1385, 0
  %v1572 = vsel %vm93, %v1386, 0
  %v1575 = vsel %vm93, %v1387, 0
  %v1578 = vsel %vm93, %v1388, 0
  %v1581 = vsel %vm93, %v1389, 0
  %1583 = vmatprep.subr.mxu0 0.0
  %1584 = vmatpush1.msra.mxu0 %v1390
  %1585 = vmatprep.subr.mxu0 0.0
  %1586 = vmatpush1.msra.mxu0 0.0
  %1587 = vmatprep.subr.mxu0 0.0
  %1588 = vmatpush1.msra.mxu0 0.0
  %1589 = vmatprep.subr.mxu0 0.0
  %1590 = vmatpush1.msra.mxu0 0.0
  %1591 = vmatprep.subr.mxu0 0.0
  %1592 = vmatpush1.msra.mxu0 0.0
  %1593 = vmatprep.subr.mxu0 0.0
  %1594 = vmatpush1.msra.mxu0 0.0
  %1595 = vmatprep.subr.mxu0 0.0
  %1596 = vmatpush1.msra.mxu0 0.0
  %1597 = vmatprep.subr.mxu0 0.0
  %1598 = vmatpush1.msra.mxu0 0.0
  %1599 = vmatprep.subr.mxu0 0.0
  %1600 = vmatpush1.msra.mxu0 0.0
  %1601 = vmatprep.subr.mxu0 0.0
  %1602 = vmatpush1.msra.mxu0 0.0
  %1603 = vmatprep.subr.mxu0 0.0
  %1604 = vmatpush1.msra.mxu0 0.0
  %1605 = vmatprep.subr.mxu0 0.0
  %1606 = vmatpush1.msra.mxu0 0.0
  %1607 = vmatprep.subr.mxu0 0.0
  %1608 = vmatpush1.msra.mxu0 0.0
  %1609 = vmatprep.subr.mxu0 0.0
  %1610 = vmatpush1.msra.mxu0 0.0
  %1611 = vmatprep.subr.mxu0 0.0
  %1612 = vmatpush1.msra.mxu0 0.0
  %1613 = vmatprep.subr.mxu0 0.0
  %1614 = vmatpush1.msra.mxu0 0.0
  %1615 = vmatprep.subr.mxu0 0.0
  %1616 = vmatpush1.msra.mxu0 0.0
  %1617 = vmatprep.subr.mxu0 0.0
  %1618 = vmatpush1.msra.mxu0 0.0
  %1619 = vmatprep.subr.mxu0 0.0
  %1620 = vmatpush1.msra.mxu0 0.0
  %1621 = vmatprep.subr.mxu0 0.0
  %1622 = vmatpush1.msra.mxu0 0.0
  %1623 = vmatprep.subr.mxu0 0.0
  %1624 = vmatpush1.msra.mxu0 0.0
  %1625 = vmatprep.subr.mxu0 0.0
  %1626 = vmatpush1.msra.mxu0 0.0
  %1627 = vmatprep.subr.mxu0 0.0
  %1628 = vmatpush1.msra.mxu0 0.0
  %1629 = vmatprep.subr.mxu0 0.0
  %1630 = vmatpush1.msra.mxu0 0.0
  %1631 = vmatprep.subr.mxu0 0.0
  %1632 = vmatpush1.msra.mxu0 0.0
  %1633 = vmatprep.subr.mxu0 0.0
  %1634 = vmatpush1.msra.mxu0 0.0
  %1635 = vmatprep.subr.mxu0 0.0
  %1636 = vmatpush1.msra.mxu0 0.0
  %1637 = vmatprep.subr.mxu0 0.0
  %1638 = vmatpush1.msra.mxu0 0.0
  %1639 = vmatprep.subr.mxu0 0.0
  %1640 = vmatpush1.msra.mxu0 0.0
  %1641 = vmatprep.subr.mxu0 0.0
  %1642 = vmatpush1.msra.mxu0 0.0
  %1643 = vmatprep.subr.mxu0 0.0
  %1644 = vmatpush1.msra.mxu0 0.0
  %1645 = vmatprep.subr.mxu0 0.0
  %1646 = vmatpush1.msra.mxu0 0.0
  %1647 = vmatprep.mubr.f32.mxu0 0.0
  %1648 = vmatmul.mubr.f32.gmra.mrb[0].mxu0 %v1392
  %v1649 = vpop.f32.mrb[0].mxu0
  %v1650 = vadd.f32 0.0, %v1649
  %v1651 = vpop.f32.mrb[0].mxu0
  %1652 = vmatprep.mubr.f32.mxu0 0.0
  %1653 = vmatmul.mubr.f32.gmra.mrb[0].mxu0 %v1395
  %v1654 = vpop.f32.mrb[0].mxu0
  %v1655 = vadd.f32 0.0, %v1654
  %v1656 = vpop.f32.mrb[0].mxu0
  %1657 = vmatprep.mubr.f32.mxu0 0.0
  %1658 = vmatmul.mubr.f32.gmra.mrb[0].mxu0 %v1398
  %v1659 = vpop.f32.mrb[0].mxu0
  %v1660 = vadd.f32 0.0, %v1659
  %v1661 = vpop.f32.mrb[0].mxu0
  %1662 = vmatprep.mubr.f32.mxu0 0.0
  %1663 = vmatmul.mubr.f32.gmra.mrb[0].mxu0 %v1401
  %v1664 = vpop.f32.mrb[0].mxu0
  %v1665 = vadd.f32 0.0, %v1664
  %v1666 = vpop.f32.mrb[0].mxu0
  %1667 = vmatprep.mubr.f32.mxu0 0.0
  %1668 = vmatmul.mubr.f32.gmra.mrb[0].mxu0 %v1404
  %v1669 = vpop.f32.mrb[0].mxu0
  %v1670 = vadd.f32 0.0, %v1669
  %v1671 = vpop.f32.mrb[0].mxu0
  %1672 = vmatprep.mubr.f32.mxu0 0.0
  %1673 = vmatmul.mubr.f32.gmra.mrb[0].mxu0 %v1407
  %v1674 = vpop.f32.mrb[0].mxu0
  %v1675 = vadd.f32 0.0, %v1674
  %v1676 = vpop.f32.mrb[0].mxu0
  %1677 = vmatprep.mubr.f32.mxu0 0.0
  %1678 = vmatmul.mubr.f32.gmra.mrb[0].mxu0 %v1410
  %v1679 = vpop.f32.mrb[0].mxu0
  %v1680 = vadd.f32 0.0, %v1679
  %v1681 = vpop.f32.mrb[0].mxu0
  %1682 = vmatprep.mubr.f32.mxu0 0.0
  %1683 = vmatmul.mubr.f32.gmra.mrb[0].mxu0 %v1413
  %v1684 = vpop.f32.mrb[0].mxu0
  %v1685 = vadd.f32 0.0, %v1684
  %v1686 = vpop.f32.mrb[0].mxu0
  %1687 = vmatprep.mubr.f32.mxu0 0.0
  %1688 = vmatmul.mubr.f32.gmra.mrb[0].mxu0 %v1416
  %v1689 = vpop.f32.mrb[0].mxu0
  %v1690 = vadd.f32 0.0, %v1689
  %v1691 = vpop.f32.mrb[0].mxu0
  %1692 = vmatprep.mubr.f32.mxu0 0.0
  %1693 = vmatmul.mubr.f32.gmra.mrb[0].mxu0 %v1419
  %v1694 = vpop.f32.mrb[0].mxu0
  %v1695 = vadd.f32 0.0, %v1694
  %v1696 = vpop.f32.mrb[0].mxu0
  %1697 = vmatprep.mubr.f32.mxu0 0.0
  %1698 = vmatmul.mubr.f32.gmra.mrb[0].mxu0 %v1422
  %v1699 = vpop.f32.mrb[0].mxu0
  %v1700 = vadd.f32 0.0, %v1699
  %v1701 = vpop.f32.mrb[0].mxu0
  %1702 = vmatprep.mubr.f32.mxu0 0.0
  %1703 = vmatmul.mubr.f32.gmra.mrb[0].mxu0 %v1425
  %v1704 = vpop.f32.mrb[0].mxu0
  %v1705 = vadd.f32 0.0, %v1704
  %v1706 = vpop.f32.mrb[0].mxu0
  %1707 = vmatprep.mubr.f32.mxu0 0.0
  %1708 = vmatmul.mubr.f32.gmra.mrb[0].mxu0 %v1428
  %v1709 = vpop.f32.mrb[0].mxu0
  %v1710 = vadd.f32 0.0, %v1709
  %v1711 = vpop.f32.mrb[0].mxu0
  %1712 = vmatprep.mubr.f32.mxu0 0.0
  %1713 = vmatmul.mubr.f32.gmra.mrb[0].mxu0 %v1431
  %v1714 = vpop.f32.mrb[0].mxu0
  %v1715 = vadd.f32 0.0, %v1714
  %v1716 = vpop.f32.mrb[0].mxu0
  %1717 = vmatprep.mubr.f32.mxu0 0.0
  %1718 = vmatmul.mubr.f32.gmra.mrb[0].mxu0 %v1434
  %v1719 = vpop.f32.mrb[0].mxu0
  %v1720 = vadd.f32 0.0, %v1719
  %v1721 = vpop.f32.mrb[0].mxu0
  %1722 = vmatprep.mubr.f32.mxu0 0.0
  %1723 = vmatmul.mubr.f32.gmra.mrb[0].mxu0 %v1437
  %v1724 = vpop.f32.mrb[0].mxu0
  %v1725 = vadd.f32 0.0, %v1724
  %v1726 = vpop.f32.mrb[0].mxu0
  %1727 = vmatprep.mubr.f32.mxu0 0.0
  %1728 = vmatmul.mubr.f32.gmra.mrb[0].mxu0 %v1440
  %v1729 = vpop.f32.mrb[0].mxu0
  %v1730 = vadd.f32 0.0, %v1729
  %v1731 = vpop.f32.mrb[0].mxu0
  %1732 = vmatprep.mubr.f32.mxu0 0.0
  %1733 = vmatmul.mubr.f32.gmra.mrb[0].mxu0 %v1443
  %v1734 = vpop.f32.mrb[0].mxu0
  %v1735 = vadd.f32 0.0, %v1734
  %v1736 = vpop.f32.mrb[0].mxu0
  %1737 = vmatprep.mubr.f32.mxu0 0.0
  %1738 = vmatmul.mubr.f32.gmra.mrb[0].mxu0 %v1446
  %v1739 = vpop.f32.mrb[0].mxu0
  %v1740 = vadd.f32 0.0, %v1739
  %v1741 = vpop.f32.mrb[0].mxu0
  %1742 = vmatprep.mubr.f32.mxu0 0.0
  %1743 = vmatmul.mubr.f32.gmra.mrb[0].mxu0 %v1449
  %v1744 = vpop.f32.mrb[0].mxu0
  %v1745 = vadd.f32 0.0, %v1744
  %v1746 = vpop.f32.mrb[0].mxu0
  %1747 = vmatprep.mubr.f32.mxu0 0.0
  %1748 = vmatmul.mubr.f32.gmra.mrb[0].mxu0 %v1452
  %v1749 = vpop.f32.mrb[0].mxu0
  %v1750 = vadd.f32 0.0, %v1749
  %v1751 = vpop.f32.mrb[0].mxu0
  %1752 = vmatprep.mubr.f32.mxu0 0.0
  %1753 = vmatmul.mubr.f32.gmra.mrb[0].mxu0 %v1455
  %v1754 = vpop.f32.mrb[0].mxu0
  %v1755 = vadd.f32 0.0, %v1754
  %v1756 = vpop.f32.mrb[0].mxu0
  %1757 = vmatprep.mubr.f32.mxu0 0.0
  %1758 = vmatmul.mubr.f32.gmra.mrb[0].mxu0 %v1458
  %v1759 = vpop.f32.mrb[0].mxu0
  %v1760 = vadd.f32 0.0, %v1759
  %v1761 = vpop.f32.mrb[0].mxu0
  %1762 = vmatprep.mubr.f32.mxu0 0.0
  %1763 = vmatmul.mubr.f32.gmra.mrb[0].mxu0 %v1461
  %v1764 = vpop.f32.mrb[0].mxu0
  %v1765 = vadd.f32 0.0, %v1764
  %v1766 = vpop.f32.mrb[0].mxu0
  %1767 = vmatprep.mubr.f32.mxu0 0.0
  %1768 = vmatmul.mubr.f32.gmra.mrb[0].mxu0 %v1464
  %v1769 = vpop.f32.mrb[0].mxu0
  %v1770 = vadd.f32 0.0, %v1769
  %v1771 = vpop.f32.mrb[0].mxu0
  %1772 = vmatprep.mubr.f32.mxu0 0.0
  %1773 = vmatmul.mubr.f32.gmra.mrb[0].mxu0 %v1467
  %v1774 = vpop.f32.mrb[0].mxu0
  %v1775 = vadd.f32 0.0, %v1774
  %v1776 = vpop.f32.mrb[0].mxu0
  %1777 = vmatprep.mubr.f32.mxu0 0.0
  %1778 = vmatmul.mubr.f32.gmra.mrb[0].mxu0 %v1470
  %v1779 = vpop.f32.mrb[0].mxu0
  %v1780 = vadd.f32 0.0, %v1779
  %v1781 = vpop.f32.mrb[0].mxu0
  %1782 = vmatprep.mubr.f32.mxu0 0.0
  %1783 = vmatmul.mubr.f32.gmra.mrb[0].mxu0 %v1473
  %v1784 = vpop.f32.mrb[0].mxu0
  %v1785 = vadd.f32 0.0, %v1784
  %v1786 = vpop.f32.mrb[0].mxu0
  %1787 = vmatprep.mubr.f32.mxu0 0.0
  %1788 = vmatmul.mubr.f32.gmra.mrb[0].mxu0 %v1476
  %v1789 = vpop.f32.mrb[0].mxu0
  %v1790 = vadd.f32 0.0, %v1789
  %v1791 = vpop.f32.mrb[0].mxu0
  %1792 = vmatprep.mubr.f32.mxu0 0.0
  %1793 = vmatmul.mubr.f32.gmra.mrb[0].mxu0 %v1479
  %v1794 = vpop.f32.mrb[0].mxu0
  %v1795 = vadd.f32 0.0, %v1794
  %v1796 = vpop.f32.mrb[0].mxu0
  %1797 = vmatprep.mubr.f32.mxu0 0.0
  %1798 = vmatmul.mubr.f32.gmra.mrb[0].mxu0 %v1482
  %v1799 = vpop.f32.mrb[0].mxu0
  %v1800 = vadd.f32 0.0, %v1799
  %v1801 = vpop.f32.mrb[0].mxu0
  %1802 = vmatprep.mubr.f32.mxu0 0.0
  %1803 = vmatmul.mubr.f32.gmra.mrb[0].mxu0 %v1485
  %v1804 = vpop.f32.mrb[0].mxu0
  %v1805 = vadd.f32 0.0, %v1804
  %v1806 = vpop.f32.mrb[0].mxu0
  %1807 = vmatprep.mubr.f32.mxu0 0.0
  %1808 = vmatmul.mubr.f32.gmra.mrb[0].mxu0 %v1488
  %v1809 = vpop.f32.mrb[0].mxu0
  %v1810 = vadd.f32 0.0, %v1809
  %v1811 = vpop.f32.mrb[0].mxu0
  %1812 = vmatprep.mubr.f32.mxu0 0.0
  %1813 = vmatmul.mubr.f32.gmra.mrb[0].mxu0 %v1491
  %v1814 = vpop.f32.mrb[0].mxu0
  %v1815 = vadd.f32 0.0, %v1814
  %v1816 = vpop.f32.mrb[0].mxu0
  %1817 = vmatprep.mubr.f32.mxu0 0.0
  %1818 = vmatmul.mubr.f32.gmra.mrb[0].mxu0 %v1494
  %v1819 = vpop.f32.mrb[0].mxu0
  %v1820 = vadd.f32 0.0, %v1819
  %v1821 = vpop.f32.mrb[0].mxu0
  %1822 = vmatprep.mubr.f32.mxu0 0.0
  %1823 = vmatmul.mubr.f32.gmra.mrb[0].mxu0 %v1497
  %v1824 = vpop.f32.mrb[0].mxu0
  %v1825 = vadd.f32 0.0, %v1824
  %v1826 = vpop.f32.mrb[0].mxu0
  %1827 = vmatprep.mubr.f32.mxu0 0.0
  %1828 = vmatmul.mubr.f32.gmra.mrb[0].mxu0 %v1500
  %v1829 = vpop.f32.mrb[0].mxu0
  %v1830 = vadd.f32 0.0, %v1829
  %v1831 = vpop.f32.mrb[0].mxu0
  %1832 = vmatprep.mubr.f32.mxu0 0.0
  %1833 = vmatmul.mubr.f32.gmra.mrb[0].mxu0 %v1503
  %v1834 = vpop.f32.mrb[0].mxu0
  %v1835 = vadd.f32 0.0, %v1834
  %v1836 = vpop.f32.mrb[0].mxu0
  %1837 = vmatprep.mubr.f32.mxu0 0.0
  %1838 = vmatmul.mubr.f32.gmra.mrb[0].mxu0 %v1506
  %v1839 = vpop.f32.mrb[0].mxu0
  %v1840 = vadd.f32 0.0, %v1839
  %v1841 = vpop.f32.mrb[0].mxu0
  %1842 = vmatprep.mubr.f32.mxu0 0.0
  %1843 = vmatmul.mubr.f32.gmra.mrb[0].mxu0 %v1509
  %v1844 = vpop.f32.mrb[0].mxu0
  %v1845 = vadd.f32 0.0, %v1844
  %v1846 = vpop.f32.mrb[0].mxu0
  %1847 = vmatprep.mubr.f32.mxu0 0.0
  %1848 = vmatmul.mubr.f32.gmra.mrb[0].mxu0 %v1512
  %v1849 = vpop.f32.mrb[0].mxu0
  %v1850 = vadd.f32 0.0, %v1849
  %v1851 = vpop.f32.mrb[0].mxu0
  %1852 = vmatprep.mubr.f32.mxu0 0.0
  %1853 = vmatmul.mubr.f32.gmra.mrb[0].mxu0 %v1515
  %v1854 = vpop.f32.mrb[0].mxu0
  %v1855 = vadd.f32 0.0, %v1854
  %v1856 = vpop.f32.mrb[0].mxu0
  %1857 = vmatprep.mubr.f32.mxu0 0.0
  %1858 = vmatmul.mubr.f32.gmra.mrb[0].mxu0 %v1518
  %v1859 = vpop.f32.mrb[0].mxu0
  %v1860 = vadd.f32 0.0, %v1859
  %v1861 = vpop.f32.mrb[0].mxu0
  %1862 = vmatprep.mubr.f32.mxu0 0.0
  %1863 = vmatmul.mubr.f32.gmra.mrb[0].mxu0 %v1521
  %v1864 = vpop.f32.mrb[0].mxu0
  %v1865 = vadd.f32 0.0, %v1864
  %v1866 = vpop.f32.mrb[0].mxu0
  %1867 = vmatprep.mubr.f32.mxu0 0.0
  %1868 = vmatmul.mubr.f32.gmra.mrb[0].mxu0 %v1524
  %v1869 = vpop.f32.mrb[0].mxu0
  %v1870 = vadd.f32 0.0, %v1869
  %v1871 = vpop.f32.mrb[0].mxu0
  %1872 = vmatprep.mubr.f32.mxu0 0.0
  %1873 = vmatmul.mubr.f32.gmra.mrb[0].mxu0 %v1527
  %v1874 = vpop.f32.mrb[0].mxu0
  %v1875 = vadd.f32 0.0, %v1874
  %v1876 = vpop.f32.mrb[0].mxu0
  %1877 = vmatprep.mubr.f32.mxu0 0.0
  %1878 = vmatmul.mubr.f32.gmra.mrb[0].mxu0 %v1530
  %v1879 = vpop.f32.mrb[0].mxu0
  %v1880 = vadd.f32 0.0, %v1879
  %v1881 = vpop.f32.mrb[0].mxu0
  %1882 = vmatprep.mubr.f32.mxu0 0.0
  %1883 = vmatmul.mubr.f32.gmra.mrb[0].mxu0 %v1533
  %v1884 = vpop.f32.mrb[0].mxu0
  %v1885 = vadd.f32 0.0, %v1884
  %v1886 = vpop.f32.mrb[0].mxu0
  %1887 = vmatprep.mubr.f32.mxu0 0.0
  %1888 = vmatmul.mubr.f32.gmra.mrb[0].mxu0 %v1536
  %v1889 = vpop.f32.mrb[0].mxu0
  %v1890 = vadd.f32 0.0, %v1889
  %v1891 = vpop.f32.mrb[0].mxu0
  %1892 = vmatprep.mubr.f32.mxu0 0.0
  %1893 = vmatmul.mubr.f32.gmra.mrb[0].mxu0 %v1539
  %v1894 = vpop.f32.mrb[0].mxu0
  %v1895 = vadd.f32 0.0, %v1894
  %v1896 = vpop.f32.mrb[0].mxu0
  %1897 = vmatprep.mubr.f32.mxu0 0.0
  %1898 = vmatmul.mubr.f32.gmra.mrb[0].mxu0 %v1542
  %v1899 = vpop.f32.mrb[0].mxu0
  %v1900 = vadd.f32 0.0, %v1899
  %v1901 = vpop.f32.mrb[0].mxu0
  %1902 = vmatprep.mubr.f32.mxu0 0.0
  %1903 = vmatmul.mubr.f32.gmra.mrb[0].mxu0 %v1545
  %v1904 = vpop.f32.mrb[0].mxu0
  %v1905 = vadd.f32 0.0, %v1904
  %v1906 = vpop.f32.mrb[0].mxu0
  %1907 = vmatprep.mubr.f32.mxu0 0.0
  %1908 = vmatmul.mubr.f32.gmra.mrb[0].mxu0 %v1548
  %v1909 = vpop.f32.mrb[0].mxu0
  %v1910 = vadd.f32 0.0, %v1909
  %v1911 = vpop.f32.mrb[0].mxu0
  %1912 = vmatprep.mubr.f32.mxu0 0.0
  %1913 = vmatmul.mubr.f32.gmra.mrb[0].mxu0 %v1551
  %v1914 = vpop.f32.mrb[0].mxu0
  %v1915 = vadd.f32 0.0, %v1914
  %v1916 = vpop.f32.mrb[0].mxu0
  %1917 = vmatprep.mubr.f32.mxu0 0.0
  %1918 = vmatmul.mubr.f32.gmra.mrb[0].mxu0 %v1554
  %v1919 = vpop.f32.mrb[0].mxu0
  %v1920 = vadd.f32 0.0, %v1919
  %v1921 = vpop.f32.mrb[0].mxu0
  %1922 = vmatprep.mubr.f32.mxu0 0.0
  %1923 = vmatmul.mubr.f32.gmra.mrb[0].mxu0 %v1557
  %v1924 = vpop.f32.mrb[0].mxu0
  %v1925 = vadd.f32 0.0, %v1924
  %v1926 = vpop.f32.mrb[0].mxu0
  %1927 = vmatprep.mubr.f32.mxu0 0.0
  %1928 = vmatmul.mubr.f32.gmra.mrb[0].mxu0 %v1560
  %v1929 = vpop.f32.mrb[0].mxu0
  %v1930 = vadd.f32 0.0, %v1929
  %v1931 = vpop.f32.mrb[0].mxu0
  %1932 = vmatprep.mubr.f32.mxu0 0.0
  %1933 = vmatmul.mubr.f32.gmra.mrb[0].mxu0 %v1563
  %v1934 = vpop.f32.mrb[0].mxu0
  %v1935 = vadd.f32 0.0, %v1934
  %v1936 = vpop.f32.mrb[0].mxu0
  %1937 = vmatprep.mubr.f32.mxu0 0.0
  %1938 = vmatmul.mubr.f32.gmra.mrb[0].mxu0 %v1566
  %v1939 = vpop.f32.mrb[0].mxu0
  %v1940 = vadd.f32 0.0, %v1939
  %v1941 = vpop.f32.mrb[0].mxu0
  %1942 = vmatprep.mubr.f32.mxu0 0.0
  %1943 = vmatmul.mubr.f32.gmra.mrb[0].mxu0 %v1569
  %v1944 = vpop.f32.mrb[0].mxu0
  %v1945 = vadd.f32 0.0, %v1944
  %v1946 = vpop.f32.mrb[0].mxu0
  %1947 = vmatprep.mubr.f32.mxu0 0.0
  %1948 = vmatmul.mubr.f32.gmra.mrb[0].mxu0 %v1572
  %v1949 = vpop.f32.mrb[0].mxu0
  %v1950 = vadd.f32 0.0, %v1949
  %v1951 = vpop.f32.mrb[0].mxu0
  %1952 = vmatprep.mubr.f32.mxu0 0.0
  %1953 = vmatmul.mubr.f32.gmra.mrb[0].mxu0 %v1575
  %v1954 = vpop.f32.mrb[0].mxu0
  %v1955 = vadd.f32 0.0, %v1954
  %v1956 = vpop.f32.mrb[0].mxu0
  %1957 = vmatprep.mubr.f32.mxu0 0.0
  %1958 = vmatmul.mubr.f32.gmra.mrb[0].mxu0 %v1578
  %v1959 = vpop.f32.mrb[0].mxu0
  %v1960 = vadd.f32 0.0, %v1959
  %v1961 = vpop.f32.mrb[0].mxu0
  %1962 = vmatprep.mubr.f32.mxu0 0.0
  %1963 = vmatmul.mubr.f32.gmra.mrb[0].mxu0 %v1581
  %v1964 = vpop.f32.mrb[0].mxu0
  %v1965 = vadd.f32 0.0, %v1964
  %v1966 = vpop.f32.mrb[0].mxu0
  %1967 = vdwg.mxu0
  %v1968 = vld [vmem:[%s4] sm:$0x1]
  %v1970 = vlaneseq
  %v1971 = vshrl.u32 %v1970, 7
  %v1972 = vsub.s32 0, %v1971
  %v1973 = vrot.slane %v1968, %v1972
  %v1975 = vmul.f32 %v1650, %v1973
  %v1976 = vmul.f32 %v1655, %v1973
  %v1977 = vmul.f32 %v1660, %v1973
  %v1978 = vmul.f32 %v1665, %v1973
  %v1979 = vmul.f32 %v1670, %v1973
  %v1980 = vmul.f32 %v1675, %v1973
  %v1981 = vmul.f32 %v1680, %v1973
  %v1982 = vmul.f32 %v1685, %v1973
  %v1983 = vmul.f32 %v1690, %v1973
  %v1984 = vmul.f32 %v1695, %v1973
  %v1985 = vmul.f32 %v1700, %v1973
  %v1986 = vmul.f32 %v1705, %v1973
  %v1987 = vmul.f32 %v1710, %v1973
  %v1988 = vmul.f32 %v1715, %v1973
  %v1989 = vmul.f32 %v1720, %v1973
  %v1990 = vmul.f32 %v1725, %v1973
  %v1991 = vmul.f32 %v1730, %v1973
  %v1992 = vmul.f32 %v1735, %v1973
  %v1993 = vmul.f32 %v1740, %v1973
  %v1994 = vmul.f32 %v1745, %v1973
  %v1995 = vmul.f32 %v1750, %v1973
  %v1996 = vmul.f32 %v1755, %v1973
  %v1997 = vmul.f32 %v1760, %v1973
  %v1998 = vmul.f32 %v1765, %v1973
  %v1999 = vmul.f32 %v1770, %v1973
  %v2000 = vmul.f32 %v1775, %v1973
  %v2001 = vmul.f32 %v1780, %v1973
  %v2002 = vmul.f32 %v1785, %v1973
  %v2003 = vmul.f32 %v1790, %v1973
  %v2004 = vmul.f32 %v1795, %v1973
  %v2005 = vmul.f32 %v1800, %v1973
  %v2006 = vmul.f32 %v1805, %v1973
  %v2007 = vmul.f32 %v1810, %v1973
  %v2008 = vmul.f32 %v1815, %v1973
  %v2009 = vmul.f32 %v1820, %v1973
  %v2010 = vmul.f32 %v1825, %v1973
  %v2011 = vmul.f32 %v1830, %v1973
  %v2012 = vmul.f32 %v1835, %v1973
  %v2013 = vmul.f32 %v1840, %v1973
  %v2014 = vmul.f32 %v1845, %v1973
  %v2015 = vmul.f32 %v1850, %v1973
  %v2016 = vmul.f32 %v1855, %v1973
  %v2017 = vmul.f32 %v1860, %v1973
  %v2018 = vmul.f32 %v1865, %v1973
  %v2019 = vmul.f32 %v1870, %v1973
  %v2020 = vmul.f32 %v1875, %v1973
  %v2021 = vmul.f32 %v1880, %v1973
  %v2022 = vmul.f32 %v1885, %v1973
  %v2023 = vmul.f32 %v1890, %v1973
  %v2024 = vmul.f32 %v1895, %v1973
  %v2025 = vmul.f32 %v1900, %v1973
  %v2026 = vmul.f32 %v1905, %v1973
  %v2027 = vmul.f32 %v1910, %v1973
  %v2028 = vmul.f32 %v1915, %v1973
  %v2029 = vmul.f32 %v1920, %v1973
  %v2030 = vmul.f32 %v1925, %v1973
  %v2031 = vmul.f32 %v1930, %v1973
  %v2032 = vmul.f32 %v1935, %v1973
  %v2033 = vmul.f32 %v1940, %v1973
  %v2034 = vmul.f32 %v1945, %v1973
  %v2035 = vmul.f32 %v1950, %v1973
  %v2036 = vmul.f32 %v1955, %v1973
  %v2037 = vmul.f32 %v1960, %v1973
  %v2038 = vmul.f32 %v1965, %v1973
  %v2039 = vld [vmem:[%s6] sm:$0x1]
  %v2041 = vlaneseq
  %v2042 = vshrl.u32 %v2041, 7
  %v2043 = vsub.s32 0, %v2042
  %v2044 = vrot.slane %v2039, %v2043
  %v2046 = vadd.f32 %v1975, %v2044
  %v2047 = vadd.f32 %v1976, %v2044
  %v2048 = vadd.f32 %v1977, %v2044
  %v2049 = vadd.f32 %v1978, %v2044
  %v2050 = vadd.f32 %v1979, %v2044
  %v2051 = vadd.f32 %v1980, %v2044
  %v2052 = vadd.f32 %v1981, %v2044
  %v2053 = vadd.f32 %v1982, %v2044
  %v2054 = vadd.f32 %v1983, %v2044
  %v2055 = vadd.f32 %v1984, %v2044
  %v2056 = vadd.f32 %v1985, %v2044
  %v2057 = vadd.f32 %v1986, %v2044
  %v2058 = vadd.f32 %v1987, %v2044
  %v2059 = vadd.f32 %v1988, %v2044
  %v2060 = vadd.f32 %v1989, %v2044
  %v2061 = vadd.f32 %v1990, %v2044
  %v2062 = vadd.f32 %v1991, %v2044
  %v2063 = vadd.f32 %v1992, %v2044
  %v2064 = vadd.f32 %v1993, %v2044
  %v2065 = vadd.f32 %v1994, %v2044
  %v2066 = vadd.f32 %v1995, %v2044
  %v2067 = vadd.f32 %v1996, %v2044
  %v2068 = vadd.f32 %v1997, %v2044
  %v2069 = vadd.f32 %v1998, %v2044
  %v2070 = vadd.f32 %v1999, %v2044
  %v2071 = vadd.f32 %v2000, %v2044
  %v2072 = vadd.f32 %v2001, %v2044
  %v2073 = vadd.f32 %v2002, %v2044
  %v2074 = vadd.f32 %v2003, %v2044
  %v2075 = vadd.f32 %v2004, %v2044
  %v2076 = vadd.f32 %v2005, %v2044
  %v2077 = vadd.f32 %v2006, %v2044
  %v2078 = vadd.f32 %v2007, %v2044
  %v2079 = vadd.f32 %v2008, %v2044
  %v2080 = vadd.f32 %v2009, %v2044
  %v2081 = vadd.f32 %v2010, %v2044
  %v2082 = vadd.f32 %v2011, %v2044
  %v2083 = vadd.f32 %v2012, %v2044
  %v2084 = vadd.f32 %v2013, %v2044
  %v2085 = vadd.f32 %v2014, %v2044
  %v2086 = vadd.f32 %v2015, %v2044
  %v2087 = vadd.f32 %v2016, %v2044
  %v2088 = vadd.f32 %v2017, %v2044
  %v2089 = vadd.f32 %v2018, %v2044
  %v2090 = vadd.f32 %v2019, %v2044
  %v2091 = vadd.f32 %v2020, %v2044
  %v2092 = vadd.f32 %v2021, %v2044
  %v2093 = vadd.f32 %v2022, %v2044
  %v2094 = vadd.f32 %v2023, %v2044
  %v2095 = vadd.f32 %v2024, %v2044
  %v2096 = vadd.f32 %v2025, %v2044
  %v2097 = vadd.f32 %v2026, %v2044
  %v2098 = vadd.f32 %v2027, %v2044
  %v2099 = vadd.f32 %v2028, %v2044
  %v2100 = vadd.f32 %v2029, %v2044
  %v2101 = vadd.f32 %v2030, %v2044
  %v2102 = vadd.f32 %v2031, %v2044
  %v2103 = vadd.f32 %v2032, %v2044
  %v2104 = vadd.f32 %v2033, %v2044
  %v2105 = vadd.f32 %v2034, %v2044
  %v2106 = vadd.f32 %v2035, %v2044
  %v2107 = vadd.f32 %v2036, %v2044
  %v2108 = vadd.f32 %v2037, %v2044
  %v2109 = vadd.f32 %v2038, %v2044
  %v2110 = vxor.u32 %v2046, 2147483648
  %v2111 = vxor.u32 %v2047, 2147483648
  %v2112 = vxor.u32 %v2048, 2147483648
  %v2113 = vxor.u32 %v2049, 2147483648
  %v2114 = vxor.u32 %v2050, 2147483648
  %v2115 = vxor.u32 %v2051, 2147483648
  %v2116 = vxor.u32 %v2052, 2147483648
  %v2117 = vxor.u32 %v2053, 2147483648
  %v2118 = vxor.u32 %v2054, 2147483648
  %v2119 = vxor.u32 %v2055, 2147483648
  %v2120 = vxor.u32 %v2056, 2147483648
  %v2121 = vxor.u32 %v2057, 2147483648
  %v2122 = vxor.u32 %v2058, 2147483648
  %v2123 = vxor.u32 %v2059, 2147483648
  %v2124 = vxor.u32 %v2060, 2147483648
  %v2125 = vxor.u32 %v2061, 2147483648
  %v2126 = vxor.u32 %v2062, 2147483648
  %v2127 = vxor.u32 %v2063, 2147483648
  %v2128 = vxor.u32 %v2064, 2147483648
  %v2129 = vxor.u32 %v2065, 2147483648
  %v2130 = vxor.u32 %v2066, 2147483648
  %v2131 = vxor.u32 %v2067, 2147483648
  %v2132 = vxor.u32 %v2068, 2147483648
  %v2133 = vxor.u32 %v2069, 2147483648
  %v2134 = vxor.u32 %v2070, 2147483648
  %v2135 = vxor.u32 %v2071, 2147483648
  %v2136 = vxor.u32 %v2072, 2147483648
  %v2137 = vxor.u32 %v2073, 2147483648
  %v2138 = vxor.u32 %v2074, 2147483648
  %v2139 = vxor.u32 %v2075, 2147483648
  %v2140 = vxor.u32 %v2076, 2147483648
  %v2141 = vxor.u32 %v2077, 2147483648
  %v2142 = vxor.u32 %v2078, 2147483648
  %v2143 = vxor.u32 %v2079, 2147483648
  %v2144 = vxor.u32 %v2080, 2147483648
  %v2145 = vxor.u32 %v2081, 2147483648
  %v2146 = vxor.u32 %v2082, 2147483648
  %v2147 = vxor.u32 %v2083, 2147483648
  %v2148 = vxor.u32 %v2084, 2147483648
  %v2149 = vxor.u32 %v2085, 2147483648
  %v2150 = vxor.u32 %v2086, 2147483648
  %v2151 = vxor.u32 %v2087, 2147483648
  %v2152 = vxor.u32 %v2088, 2147483648
  %v2153 = vxor.u32 %v2089, 2147483648
  %v2154 = vxor.u32 %v2090, 2147483648
  %v2155 = vxor.u32 %v2091, 2147483648
  %v2156 = vxor.u32 %v2092, 2147483648
  %v2157 = vxor.u32 %v2093, 2147483648
  %v2158 = vxor.u32 %v2094, 2147483648
  %v2159 = vxor.u32 %v2095, 2147483648
  %v2160 = vxor.u32 %v2096, 2147483648
  %v2161 = vxor.u32 %v2097, 2147483648
  %v2162 = vxor.u32 %v2098, 2147483648
  %v2163 = vxor.u32 %v2099, 2147483648
  %v2164 = vxor.u32 %v2100, 2147483648
  %v2165 = vxor.u32 %v2101, 2147483648
  %v2166 = vxor.u32 %v2102, 2147483648
  %v2167 = vxor.u32 %v2103, 2147483648
  %v2168 = vxor.u32 %v2104, 2147483648
  %v2169 = vxor.u32 %v2105, 2147483648
  %v2170 = vxor.u32 %v2106, 2147483648
  %v2171 = vxor.u32 %v2107, 2147483648
  %v2172 = vxor.u32 %v2108, 2147483648
  %v2173 = vxor.u32 %v2109, 2147483648
  %v2174 = vmul.f32 %v2110, 1.442695
  %v2175 = vpow.pop %v2174
  %v2176 = vmul.f32 %v2111, 1.442695
  %v2177 = vpow.pop %v2176
  %v2178 = vmul.f32 %v2112, 1.442695
  %v2179 = vpow.pop %v2178
  %v2180 = vmul.f32 %v2113, 1.442695
  %v2181 = vpow.pop %v2180
  %v2182 = vmul.f32 %v2114, 1.442695
  %v2183 = vpow.pop %v2182
  %v2184 = vmul.f32 %v2115, 1.442695
  %v2185 = vpow.pop %v2184
  %v2186 = vmul.f32 %v2116, 1.442695
  %v2187 = vpow.pop %v2186
  %v2188 = vmul.f32 %v2117, 1.442695
  %v2189 = vpow.pop %v2188
  %v2190 = vmul.f32 %v2118, 1.442695
  %v2191 = vpow.pop %v2190
  %v2192 = vmul.f32 %v2119, 1.442695
  %v2193 = vpow.pop %v2192
  %v2194 = vmul.f32 %v2120, 1.442695
  %v2195 = vpow.pop %v2194
  %v2196 = vmul.f32 %v2121, 1.442695
  %v2197 = vpow.pop %v2196
  %v2198 = vmul.f32 %v2122, 1.442695
  %v2199 = vpow.pop %v2198
  %v2200 = vmul.f32 %v2123, 1.442695
  %v2201 = vpow.pop %v2200
  %v2202 = vmul.f32 %v2124, 1.442695
  %v2203 = vpow.pop %v2202
  %v2204 = vmul.f32 %v2125, 1.442695
  %v2205 = vpow.pop %v2204
  %v2206 = vmul.f32 %v2126, 1.442695
  %v2207 = vpow.pop %v2206
  %v2208 = vmul.f32 %v2127, 1.442695
  %v2209 = vpow.pop %v2208
  %v2210 = vmul.f32 %v2128, 1.442695
  %v2211 = vpow.pop %v2210
  %v2212 = vmul.f32 %v2129, 1.442695
  %v2213 = vpow.pop %v2212
  %v2214 = vmul.f32 %v2130, 1.442695
  %v2215 = vpow.pop %v2214
  %v2216 = vmul.f32 %v2131, 1.442695
  %v2217 = vpow.pop %v2216
  %v2218 = vmul.f32 %v2132, 1.442695
  %v2219 = vpow.pop %v2218
  %v2220 = vmul.f32 %v2133, 1.442695
  %v2221 = vpow.pop %v2220
  %v2222 = vmul.f32 %v2134, 1.442695
  %v2223 = vpow.pop %v2222
  %v2224 = vmul.f32 %v2135, 1.442695
  %v2225 = vpow.pop %v2224
  %v2226 = vmul.f32 %v2136, 1.442695
  %v2227 = vpow.pop %v2226
  %v2228 = vmul.f32 %v2137, 1.442695
  %v2229 = vpow.pop %v2228
  %v2230 = vmul.f32 %v2138, 1.442695
  %v2231 = vpow.pop %v2230
  %v2232 = vmul.f32 %v2139, 1.442695
  %v2233 = vpow.pop %v2232
  %v2234 = vmul.f32 %v2140, 1.442695
  %v2235 = vpow.pop %v2234
  %v2236 = vmul.f32 %v2141, 1.442695
  %v2237 = vpow.pop %v2236
  %v2238 = vmul.f32 %v2142, 1.442695
  %v2239 = vpow.pop %v2238
  %v2240 = vmul.f32 %v2143, 1.442695
  %v2241 = vpow.pop %v2240
  %v2242 = vmul.f32 %v2144, 1.442695
  %v2243 = vpow.pop %v2242
  %v2244 = vmul.f32 %v2145, 1.442695
  %v2245 = vpow.pop %v2244
  %v2246 = vmul.f32 %v2146, 1.442695
  %v2247 = vpow.pop %v2246
  %v2248 = vmul.f32 %v2147, 1.442695
  %v2249 = vpow.pop %v2248
  %v2250 = vmul.f32 %v2148, 1.442695
  %v2251 = vpow.pop %v2250
  %v2252 = vmul.f32 %v2149, 1.442695
  %v2253 = vpow.pop %v2252
  %v2254 = vmul.f32 %v2150, 1.442695
  %v2255 = vpow.pop %v2254
  %v2256 = vmul.f32 %v2151, 1.442695
  %v2257 = vpow.pop %v2256
  %v2258 = vmul.f32 %v2152, 1.442695
  %v2259 = vpow.pop %v2258
  %v2260 = vmul.f32 %v2153, 1.442695
  %v2261 = vpow.pop %v2260
  %v2262 = vmul.f32 %v2154, 1.442695
  %v2263 = vpow.pop %v2262
  %v2264 = vmul.f32 %v2155, 1.442695
  %v2265 = vpow.pop %v2264
  %v2266 = vmul.f32 %v2156, 1.442695
  %v2267 = vpow.pop %v2266
  %v2268 = vmul.f32 %v2157, 1.442695
  %v2269 = vpow.pop %v2268
  %v2270 = vmul.f32 %v2158, 1.442695
  %v2271 = vpow.pop %v2270
  %v2272 = vmul.f32 %v2159, 1.442695
  %v2273 = vpow.pop %v2272
  %v2274 = vmul.f32 %v2160, 1.442695
  %v2275 = vpow.pop %v2274
  %v2276 = vmul.f32 %v2161, 1.442695
  %v2277 = vpow.pop %v2276
  %v2278 = vmul.f32 %v2162, 1.442695
  %v2279 = vpow.pop %v2278
  %v2280 = vmul.f32 %v2163, 1.442695
  %v2281 = vpow.pop %v2280
  %v2282 = vmul.f32 %v2164, 1.442695
  %v2283 = vpow.pop %v2282
  %v2284 = vmul.f32 %v2165, 1.442695
  %v2285 = vpow.pop %v2284
  %v2286 = vmul.f32 %v2166, 1.442695
  %v2287 = vpow.pop %v2286
  %v2288 = vmul.f32 %v2167, 1.442695
  %v2289 = vpow.pop %v2288
  %v2290 = vmul.f32 %v2168, 1.442695
  %v2291 = vpow.pop %v2290
  %v2292 = vmul.f32 %v2169, 1.442695
  %v2293 = vpow.pop %v2292
  %v2294 = vmul.f32 %v2170, 1.442695
  %v2295 = vpow.pop %v2294
  %v2296 = vmul.f32 %v2171, 1.442695
  %v2297 = vpow.pop %v2296
  %v2298 = vmul.f32 %v2172, 1.442695
  %v2299 = vpow.pop %v2298
  %v2300 = vmul.f32 %v2173, 1.442695
  %v2301 = vpow.pop %v2300
  %v2302 = vadd.f32 %v2175, 1.0
  %v2303 = vadd.f32 %v2177, 1.0
  %v2304 = vadd.f32 %v2179, 1.0
  %v2305 = vadd.f32 %v2181, 1.0
  %v2306 = vadd.f32 %v2183, 1.0
  %v2307 = vadd.f32 %v2185, 1.0
  %v2308 = vadd.f32 %v2187, 1.0
  %v2309 = vadd.f32 %v2189, 1.0
  %v2310 = vadd.f32 %v2191, 1.0
  %v2311 = vadd.f32 %v2193, 1.0
  %v2312 = vadd.f32 %v2195, 1.0
  %v2313 = vadd.f32 %v2197, 1.0
  %v2314 = vadd.f32 %v2199, 1.0
  %v2315 = vadd.f32 %v2201, 1.0
  %v2316 = vadd.f32 %v2203, 1.0
  %v2317 = vadd.f32 %v2205, 1.0
  %v2318 = vadd.f32 %v2207, 1.0
  %v2319 = vadd.f32 %v2209, 1.0
  %v2320 = vadd.f32 %v2211, 1.0
  %v2321 = vadd.f32 %v2213, 1.0
  %v2322 = vadd.f32 %v2215, 1.0
  %v2323 = vadd.f32 %v2217, 1.0
  %v2324 = vadd.f32 %v2219, 1.0
  %v2325 = vadd.f32 %v2221, 1.0
  %v2326 = vadd.f32 %v2223, 1.0
  %v2327 = vadd.f32 %v2225, 1.0
  %v2328 = vadd.f32 %v2227, 1.0
  %v2329 = vadd.f32 %v2229, 1.0
  %v2330 = vadd.f32 %v2231, 1.0
  %v2331 = vadd.f32 %v2233, 1.0
  %v2332 = vadd.f32 %v2235, 1.0
  %v2333 = vadd.f32 %v2237, 1.0
  %v2334 = vadd.f32 %v2239, 1.0
  %v2335 = vadd.f32 %v2241, 1.0
  %v2336 = vadd.f32 %v2243, 1.0
  %v2337 = vadd.f32 %v2245, 1.0
  %v2338 = vadd.f32 %v2247, 1.0
  %v2339 = vadd.f32 %v2249, 1.0
  %v2340 = vadd.f32 %v2251, 1.0
  %v2341 = vadd.f32 %v2253, 1.0
  %v2342 = vadd.f32 %v2255, 1.0
  %v2343 = vadd.f32 %v2257, 1.0
  %v2344 = vadd.f32 %v2259, 1.0
  %v2345 = vadd.f32 %v2261, 1.0
  %v2346 = vadd.f32 %v2263, 1.0
  %v2347 = vadd.f32 %v2265, 1.0
  %v2348 = vadd.f32 %v2267, 1.0
  %v2349 = vadd.f32 %v2269, 1.0
  %v2350 = vadd.f32 %v2271, 1.0
  %v2351 = vadd.f32 %v2273, 1.0
  %v2352 = vadd.f32 %v2275, 1.0
  %v2353 = vadd.f32 %v2277, 1.0
  %v2354 = vadd.f32 %v2279, 1.0
  %v2355 = vadd.f32 %v2281, 1.0
  %v2356 = vadd.f32 %v2283, 1.0
  %v2357 = vadd.f32 %v2285, 1.0
  %v2358 = vadd.f32 %v2287, 1.0
  %v2359 = vadd.f32 %v2289, 1.0
  %v2360 = vadd.f32 %v2291, 1.0
  %v2361 = vadd.f32 %v2293, 1.0
  %v2362 = vadd.f32 %v2295, 1.0
  %v2363 = vadd.f32 %v2297, 1.0
  %v2364 = vadd.f32 %v2299, 1.0
  %v2365 = vadd.f32 %v2301, 1.0
  %v2366 = vrcp.pop %v2302
  %v2367 = vmul.f32 1.0, %v2366
  %v2368 = vrcp.pop %v2303
  %v2369 = vmul.f32 1.0, %v2368
  %v2370 = vrcp.pop %v2304
  %v2371 = vmul.f32 1.0, %v2370
  %v2372 = vrcp.pop %v2305
  %v2373 = vmul.f32 1.0, %v2372
  %v2374 = vrcp.pop %v2306
  %v2375 = vmul.f32 1.0, %v2374
  %v2376 = vrcp.pop %v2307
  %v2377 = vmul.f32 1.0, %v2376
  %v2378 = vrcp.pop %v2308
  %v2379 = vmul.f32 1.0, %v2378
  %v2380 = vrcp.pop %v2309
  %v2381 = vmul.f32 1.0, %v2380
  %v2382 = vrcp.pop %v2310
  %v2383 = vmul.f32 1.0, %v2382
  %v2384 = vrcp.pop %v2311
  %v2385 = vmul.f32 1.0, %v2384
  %v2386 = vrcp.pop %v2312
  %v2387 = vmul.f32 1.0, %v2386
  %v2388 = vrcp.pop %v2313
  %v2389 = vmul.f32 1.0, %v2388
  %v2390 = vrcp.pop %v2314
  %v2391 = vmul.f32 1.0, %v2390
  %v2392 = vrcp.pop %v2315
  %v2393 = vmul.f32 1.0, %v2392
  %v2394 = vrcp.pop %v2316
  %v2395 = vmul.f32 1.0, %v2394
  %v2396 = vrcp.pop %v2317
  %v2397 = vmul.f32 1.0, %v2396
  %v2398 = vrcp.pop %v2318
  %v2399 = vmul.f32 1.0, %v2398
  %v2400 = vrcp.pop %v2319
  %v2401 = vmul.f32 1.0, %v2400
  %v2402 = vrcp.pop %v2320
  %v2403 = vmul.f32 1.0, %v2402
  %v2404 = vrcp.pop %v2321
  %v2405 = vmul.f32 1.0, %v2404
  %v2406 = vrcp.pop %v2322
  %v2407 = vmul.f32 1.0, %v2406
  %v2408 = vrcp.pop %v2323
  %v2409 = vmul.f32 1.0, %v2408
  %v2410 = vrcp.pop %v2324
  %v2411 = vmul.f32 1.0, %v2410
  %v2412 = vrcp.pop %v2325
  %v2413 = vmul.f32 1.0, %v2412
  %v2414 = vrcp.pop %v2326
  %v2415 = vmul.f32 1.0, %v2414
  %v2416 = vrcp.pop %v2327
  %v2417 = vmul.f32 1.0, %v2416
  %v2418 = vrcp.pop %v2328
  %v2419 = vmul.f32 1.0, %v2418
  %v2420 = vrcp.pop %v2329
  %v2421 = vmul.f32 1.0, %v2420
  %v2422 = vrcp.pop %v2330
  %v2423 = vmul.f32 1.0, %v2422
  %v2424 = vrcp.pop %v2331
  %v2425 = vmul.f32 1.0, %v2424
  %v2426 = vrcp.pop %v2332
  %v2427 = vmul.f32 1.0, %v2426
  %v2428 = vrcp.pop %v2333
  %v2429 = vmul.f32 1.0, %v2428
  %v2430 = vrcp.pop %v2334
  %v2431 = vmul.f32 1.0, %v2430
  %v2432 = vrcp.pop %v2335
  %v2433 = vmul.f32 1.0, %v2432
  %v2434 = vrcp.pop %v2336
  %v2435 = vmul.f32 1.0, %v2434
  %v2436 = vrcp.pop %v2337
  %v2437 = vmul.f32 1.0, %v2436
  %v2438 = vrcp.pop %v2338
  %v2439 = vmul.f32 1.0, %v2438
  %v2440 = vrcp.pop %v2339
  %v2441 = vmul.f32 1.0, %v2440
  %v2442 = vrcp.pop %v2340
  %v2443 = vmul.f32 1.0, %v2442
  %v2444 = vrcp.pop %v2341
  %v2445 = vmul.f32 1.0, %v2444
  %v2446 = vrcp.pop %v2342
  %v2447 = vmul.f32 1.0, %v2446
  %v2448 = vrcp.pop %v2343
  %v2449 = vmul.f32 1.0, %v2448
  %v2450 = vrcp.pop %v2344
  %v2451 = vmul.f32 1.0, %v2450
  %v2452 = vrcp.pop %v2345
  %v2453 = vmul.f32 1.0, %v2452
  %v2454 = vrcp.pop %v2346
  %v2455 = vmul.f32 1.0, %v2454
  %v2456 = vrcp.pop %v2347
  %v2457 = vmul.f32 1.0, %v2456
  %v2458 = vrcp.pop %v2348
  %v2459 = vmul.f32 1.0, %v2458
  %v2460 = vrcp.pop %v2349
  %v2461 = vmul.f32 1.0, %v2460
  %v2462 = vrcp.pop %v2350
  %v2463 = vmul.f32 1.0, %v2462
  %v2464 = vrcp.pop %v2351
  %v2465 = vmul.f32 1.0, %v2464
  %v2466 = vrcp.pop %v2352
  %v2467 = vmul.f32 1.0, %v2466
  %v2468 = vrcp.pop %v2353
  %v2469 = vmul.f32 1.0, %v2468
  %v2470 = vrcp.pop %v2354
  %v2471 = vmul.f32 1.0, %v2470
  %v2472 = vrcp.pop %v2355
  %v2473 = vmul.f32 1.0, %v2472
  %v2474 = vrcp.pop %v2356
  %v2475 = vmul.f32 1.0, %v2474
  %v2476 = vrcp.pop %v2357
  %v2477 = vmul.f32 1.0, %v2476
  %v2478 = vrcp.pop %v2358
  %v2479 = vmul.f32 1.0, %v2478
  %v2480 = vrcp.pop %v2359
  %v2481 = vmul.f32 1.0, %v2480
  %v2482 = vrcp.pop %v2360
  %v2483 = vmul.f32 1.0, %v2482
  %v2484 = vrcp.pop %v2361
  %v2485 = vmul.f32 1.0, %v2484
  %v2486 = vrcp.pop %v2362
  %v2487 = vmul.f32 1.0, %v2486
  %v2488 = vrcp.pop %v2363
  %v2489 = vmul.f32 1.0, %v2488
  %v2490 = vrcp.pop %v2364
  %v2491 = vmul.f32 1.0, %v2490
  %v2492 = vrcp.pop %v2365
  %v2493 = vmul.f32 1.0, %v2492
  %v2494 = vmul.f32 %v2046, %v2367
  %v2495 = vmul.f32 %v2047, %v2369
  %v2496 = vmul.f32 %v2048, %v2371
  %v2497 = vmul.f32 %v2049, %v2373
  %v2498 = vmul.f32 %v2050, %v2375
  %v2499 = vmul.f32 %v2051, %v2377
  %v2500 = vmul.f32 %v2052, %v2379
  %v2501 = vmul.f32 %v2053, %v2381
  %v2502 = vmul.f32 %v2054, %v2383
  %v2503 = vmul.f32 %v2055, %v2385
  %v2504 = vmul.f32 %v2056, %v2387
  %v2505 = vmul.f32 %v2057, %v2389
  %v2506 = vmul.f32 %v2058, %v2391
  %v2507 = vmul.f32 %v2059, %v2393
  %v2508 = vmul.f32 %v2060, %v2395
  %v2509 = vmul.f32 %v2061, %v2397
  %v2510 = vmul.f32 %v2062, %v2399
  %v2511 = vmul.f32 %v2063, %v2401
  %v2512 = vmul.f32 %v2064, %v2403
  %v2513 = vmul.f32 %v2065, %v2405
  %v2514 = vmul.f32 %v2066, %v2407
  %v2515 = vmul.f32 %v2067, %v2409
  %v2516 = vmul.f32 %v2068, %v2411
  %v2517 = vmul.f32 %v2069, %v2413
  %v2518 = vmul.f32 %v2070, %v2415
  %v2519 = vmul.f32 %v2071, %v2417
  %v2520 = vmul.f32 %v2072, %v2419
  %v2521 = vmul.f32 %v2073, %v2421
  %v2522 = vmul.f32 %v2074, %v2423
  %v2523 = vmul.f32 %v2075, %v2425
  %v2524 = vmul.f32 %v2076, %v2427
  %v2525 = vmul.f32 %v2077, %v2429
  %v2526 = vmul.f32 %v2078, %v2431
  %v2527 = vmul.f32 %v2079, %v2433
  %v2528 = vmul.f32 %v2080, %v2435
  %v2529 = vmul.f32 %v2081, %v2437
  %v2530 = vmul.f32 %v2082, %v2439
  %v2531 = vmul.f32 %v2083, %v2441
  %v2532 = vmul.f32 %v2084, %v2443
  %v2533 = vmul.f32 %v2085, %v2445
  %v2534 = vmul.f32 %v2086, %v2447
  %v2535 = vmul.f32 %v2087, %v2449
  %v2536 = vmul.f32 %v2088, %v2451
  %v2537 = vmul.f32 %v2089, %v2453
  %v2538 = vmul.f32 %v2090, %v2455
  %v2539 = vmul.f32 %v2091, %v2457
  %v2540 = vmul.f32 %v2092, %v2459
  %v2541 = vmul.f32 %v2093, %v2461
  %v2542 = vmul.f32 %v2094, %v2463
  %v2543 = vmul.f32 %v2095, %v2465
  %v2544 = vmul.f32 %v2096, %v2467
  %v2545 = vmul.f32 %v2097, %v2469
  %v2546 = vmul.f32 %v2098, %v2471
  %v2547 = vmul.f32 %v2099, %v2473
  %v2548 = vmul.f32 %v2100, %v2475
  %v2549 = vmul.f32 %v2101, %v2477
  %v2550 = vmul.f32 %v2102, %v2479
  %v2551 = vmul.f32 %v2103, %v2481
  %v2552 = vmul.f32 %v2104, %v2483
  %v2553 = vmul.f32 %v2105, %v2485
  %v2554 = vmul.f32 %v2106, %v2487
  %v2555 = vmul.f32 %v2107, %v2489
  %v2556 = vmul.f32 %v2108, %v2491
  %v2557 = vmul.f32 %v2109, %v2493
  %2558 = vst.msk [vmem:[%s8] sm:$0xff] %vm1261, %v2494
  %2559 = vst.msk [vmem:[%s8 + $0x8] sm:$0xff] %vm1261, %v2495
  %2560 = vst.msk [vmem:[%s8 + $0x10] sm:$0xff] %vm1261, %v2496
  %2561 = vst.msk [vmem:[%s8 + $0x18] sm:$0xff] %vm1261, %v2497
  %2562 = vst.msk [vmem:[%s8 + $0x20] sm:$0xff] %vm1261, %v2498
  %2563 = vst.msk [vmem:[%s8 + $0x28] sm:$0xff] %vm1261, %v2499
  %2564 = vst.msk [vmem:[%s8 + $0x30] sm:$0xff] %vm1261, %v2500
  %2565 = vst.msk [vmem:[%s8 + $0x38] sm:$0xff] %vm1261, %v2501
  %2566 = vst.msk [vmem:[%s8 + $0x40] sm:$0xff] %vm1261, %v2502
  %2567 = vst.msk [vmem:[%s8 + $0x48] sm:$0xff] %vm1261, %v2503
  %2568 = vst.msk [vmem:[%s8 + $0x50] sm:$0xff] %vm1261, %v2504
  %2569 = vst.msk [vmem:[%s8 + $0x58] sm:$0xff] %vm1261, %v2505
  %2570 = vst.msk [vmem:[%s8 + $0x60] sm:$0xff] %vm1261, %v2506
  %2571 = vst.msk [vmem:[%s8 + $0x68] sm:$0xff] %vm1261, %v2507
  %2572 = vst.msk [vmem:[%s8 + $0x70] sm:$0xff] %vm1261, %v2508
  %2573 = vst.msk [vmem:[%s8 + $0x78] sm:$0xff] %vm1261, %v2509
  %2574 = vst.msk [vmem:[%s8 + $0x80] sm:$0xff] %vm1261, %v2510
  %2575 = vst.msk [vmem:[%s8 + $0x88] sm:$0xff] %vm1261, %v2511
  %2576 = vst.msk [vmem:[%s8 + $0x90] sm:$0xff] %vm1261, %v2512
  %2577 = vst.msk [vmem:[%s8 + $0x98] sm:$0xff] %vm1261, %v2513
  %2578 = vst.msk [vmem:[%s8 + $0xa0] sm:$0xff] %vm1261, %v2514
  %2579 = vst.msk [vmem:[%s8 + $0xa8] sm:$0xff] %vm1261, %v2515
  %2580 = vst.msk [vmem:[%s8 + $0xb0] sm:$0xff] %vm1261, %v2516
  %2581 = vst.msk [vmem:[%s8 + $0xb8] sm:$0xff] %vm1261, %v2517
  %2582 = vst.msk [vmem:[%s8 + $0xc0] sm:$0xff] %vm1261, %v2518
  %2583 = vst.msk [vmem:[%s8 + $0xc8] sm:$0xff] %vm1261, %v2519
  %2584 = vst.msk [vmem:[%s8 + $0xd0] sm:$0xff] %vm1261, %v2520
  %2585 = vst.msk [vmem:[%s8 + $0xd8] sm:$0xff] %vm1261, %v2521
  %2586 = vst.msk [vmem:[%s8 + $0xe0] sm:$0xff] %vm1261, %v2522
  %2587 = vst.msk [vmem:[%s8 + $0xe8] sm:$0xff] %vm1261, %v2523
  %2588 = vst.msk [vmem:[%s8 + $0xf0] sm:$0xff] %vm1261, %v2524
  %2589 = vst.msk [vmem:[%s8 + $0xf8] sm:$0xff] %vm1261, %v2525
  %2590 = vst.msk [vmem:[%s8 + $0x100] sm:$0xff] %vm1261, %v2526
  %2591 = vst.msk [vmem:[%s8 + $0x108] sm:$0xff] %vm1261, %v2527
  %2592 = vst.msk [vmem:[%s8 + $0x110] sm:$0xff] %vm1261, %v2528
  %2593 = vst.msk [vmem:[%s8 + $0x118] sm:$0xff] %vm1261, %v2529
  %2594 = vst.msk [vmem:[%s8 + $0x120] sm:$0xff] %vm1261, %v2530
  %2595 = vst.msk [vmem:[%s8 + $0x128] sm:$0xff] %vm1261, %v2531
  %2596 = vst.msk [vmem:[%s8 + $0x130] sm:$0xff] %vm1261, %v2532
  %2597 = vst.msk [vmem:[%s8 + $0x138] sm:$0xff] %vm1261, %v2533
  %2598 = vst.msk [vmem:[%s8 + $0x140] sm:$0xff] %vm1261, %v2534
  %2599 = vst.msk [vmem:[%s8 + $0x148] sm:$0xff] %vm1261, %v2535
  %2600 = vst.msk [vmem:[%s8 + $0x150] sm:$0xff] %vm1261, %v2536
  %2601 = vst.msk [vmem:[%s8 + $0x158] sm:$0xff] %vm1261, %v2537
  %2602 = vst.msk [vmem:[%s8 + $0x160] sm:$0xff] %vm1261, %v2538
  %2603 = vst.msk [vmem:[%s8 + $0x168] sm:$0xff] %vm1261, %v2539
  %2604 = vst.msk [vmem:[%s8 + $0x170] sm:$0xff] %vm1261, %v2540
  %2605 = vst.msk [vmem:[%s8 + $0x178] sm:$0xff] %vm1261, %v2541
  %2606 = vst.msk [vmem:[%s8 + $0x180] sm:$0xff] %vm1261, %v2542
  %2607 = vst.msk [vmem:[%s8 + $0x188] sm:$0xff] %vm1261, %v2543
  %2608 = vst.msk [vmem:[%s8 + $0x190] sm:$0xff] %vm1261, %v2544
  %2609 = vst.msk [vmem:[%s8 + $0x198] sm:$0xff] %vm1261, %v2545
  %2610 = vst.msk [vmem:[%s8 + $0x1a0] sm:$0xff] %vm1261, %v2546
  %2611 = vst.msk [vmem:[%s8 + $0x1a8] sm:$0xff] %vm1261, %v2547
  %2612 = vst.msk [vmem:[%s8 + $0x1b0] sm:$0xff] %vm1261, %v2548
  %2613 = vst.msk [vmem:[%s8 + $0x1b8] sm:$0xff] %vm1261, %v2549
  %2614 = vst.msk [vmem:[%s8 + $0x1c0] sm:$0xff] %vm1261, %v2550
  %2615 = vst.msk [vmem:[%s8 + $0x1c8] sm:$0xff] %vm1261, %v2551
  %2616 = vst.msk [vmem:[%s8 + $0x1d0] sm:$0xff] %vm1261, %v2552
  %2617 = vst.msk [vmem:[%s8 + $0x1d8] sm:$0xff] %vm1261, %v2553
  %2618 = vst.msk [vmem:[%s8 + $0x1e0] sm:$0xff] %vm1261, %v2554
  %2619 = vst.msk [vmem:[%s8 + $0x1e8] sm:$0xff] %vm1261, %v2555
  %2620 = vst.msk [vmem:[%s8 + $0x1f0] sm:$0xff] %vm1261, %v2556
  %2621 = vst.msk [vmem:[%s8 + $0x1f8] sm:$0xff] %vm1261, %v2557
  // Predicated region
  $region30: #{tpu_custom_call.1} parent=0 // pred_check
    _
  $region31: #{tpu_custom_call.1} parent=0 // pred_check_branch
    %2623 = sbr.rel (0) target = $region33
  $region32: #{tpu_custom_call.1} parent=0 // pred_region
    _
  $region33: #{tpu_custom_call.1} parent=0 // pred_fallthru
    _
  // Predicated region
  $region34: #{tpu_custom_call.1} parent=0 // pred_check
    _
  $region35: #{tpu_custom_call.1} parent=0 // pred_check_branch
    %2625 = sbr.rel (0) target = $region37
  $region36: #{tpu_custom_call.1} parent=0 // pred_region
    _
  $region37: #{tpu_custom_call.1} parent=0 // pred_fallthru
    _
  // Predicated region
  $region38: #{tpu_custom_call.1} parent=0 // pred_check
    _
  $region39: #{tpu_custom_call.1} parent=0 // pred_check_branch
    %2627 = sbr.rel (0) target = $region41
  $region40: #{tpu_custom_call.1} parent=0 // pred_region
    _
  $region41: #{tpu_custom_call.1} parent=0 // pred_fallthru
    _
  // Predicated region
  $region42: #{tpu_custom_call.1} parent=0 // pred_check
    _
  $region43: #{tpu_custom_call.1} parent=0 // pred_check_branch
    %2629 = sbr.rel (0) target = $region45
  $region44: #{tpu_custom_call.1} parent=0 // pred_region
    _
  $region45: #{tpu_custom_call.1} parent=0 // pred_fallthru
    _

</llo_original>
